<compile_context>
chip_gen: v7x
topology: tpu7x:2x2x1
jax: 0.10.0
libtpu: 0.0.40
codegen_flags: <defaults>
</compile_context>

<pallas_src>
import functools

import jax
import jax.numpy as jnp
import numpy as np
from jax import lax
from jax.experimental import pallas as pl
from jax.experimental.pallas import tpu as pltpu


# -----------------------------------------------------------------------------
# Pallas kernel: the sequential LSTM recurrence over one time chunk.
# -----------------------------------------------------------------------------
def _lstm_recurrence_kernel(
    lens_ref,  # (Bb, 1)  int32  target_lengths - 1
    h0_ref,    # (Bb, H)  f32    initial hidden state
    c0_ref,    # (Bb, H)  f32    initial cell state
    whh_ref,   # (H, 4H)  stream dtype  W_hh^T (PyTorch gate order i, f, g, o)
    xg_ref,    # (Tc, Bb, 4H) stream dtype  precomputed x @ W_ih^T + b_ih + b_hh
    hout_ref,  # (Tc, Bb, H)  stream dtype  masked hidden states
    h_scr,     # (Bb, H) f32 VMEM scratch (persists across time chunks)
    c_scr,     # (Bb, H) f32 VMEM scratch
    *,
    hidden_dim: int,
    time_chunk: int,
    unroll: int,
):
    H = hidden_dim
    tc_idx = pl.program_id(1)  # time-chunk index ('arbitrary', innermost)

    # Initialize carried state once per batch block (time chunk 0).
    @pl.when(tc_idx == 0)
    def _():
        h_scr[...] = h0_ref[...]
        c_scr[...] = c0_ref[...]

    whh = whh_ref[...]        # hoisted: loaded once per chunk, reused each step
    lens_m1 = lens_ref[...]   # (Bb, 1) int32, resident

    def sigmoid_via_tanh(x):
        # One EUP pass (tanh) instead of two (exp + reciprocal).
        return 0.5 * (jnp.tanh(0.5 * x) + 1.0)

    def step(t, carry):
        h = h_scr[...]
        c = c_scr[...]

        # Only the unavoidable recurrence matmul per step (input gates hoisted).
        hh = jnp.dot(h.astype(whh.dtype), whh, preferred_element_type=jnp.float32)
        gates = xg_ref[t].astype(jnp.float32) + hh

        i_g = sigmoid_via_tanh(gates[:, 0 * H:1 * H])
        f_g = sigmoid_via_tanh(gates[:, 1 * H:2 * H])
        g_g = jnp.tanh(gates[:, 2 * H:3 * H])
        o_g = sigmoid_via_tanh(gates[:, 3 * H:4 * H])

        c_new = f_g * c + i_g * g_g
        h_new = o_g * jnp.tanh(c_new)

        # pack_padded_sequence semantics: step t processed only if
        # t_global < target_length - 1; otherwise state freezes, output is zero.
        t_global = tc_idx * time_chunk + t
        valid = t_global < lens_m1                      # (Bb, 1) bool
        h_scr[...] = jnp.where(valid, h_new, h)
        c_scr[...] = jnp.where(valid, c_new, c)
        # Store into the chunk's VMEM output block; the HBM writeback is one
        # bulk DMA per chunk handled by the pipeline.
        hout_ref[t] = jnp.where(valid, h_new, 0.0).astype(hout_ref.dtype)
        return carry

    lax.fori_loop(0, time_chunk, step, 0, unroll=unroll)


# -----------------------------------------------------------------------------
# Wrapper: embedding, concat, hoisted input/output projections in plain JAX.
# -----------------------------------------------------------------------------
def lstm_decoder_forward(params, encoder_out, padded_target, target_lengths,
                         *, concat_encoder_input=True, init_state_context=True,
                         stream_dtype=jnp.bfloat16, time_chunk=8,
                         batch_blocks=1, unroll=4):
    B, L = padded_target.shape
    E = encoder_out.shape[1]
    H = params["w_hh"].shape[1]
    V = params["w_out"].shape[0]

    assert B % batch_blocks == 0
    Bb = B // batch_blocks
    # (8, 128) tiling rule: second-last block dim must be 8-aligned or full.
    assert batch_blocks == 1 or Bb % 8 == 0

    # pack/pad_packed semantics: outputs span max(target_lengths) - 1 steps.
    # (host-static value; this wrapper is not intended to be jit'ed over lengths)
    T = int(np.max(np.asarray(target_lengths))) - 1
    if T <= 0:  # degenerate case: every sequence has length 1
        return (jnp.zeros((0, V), jnp.float32),
                padded_target[:, 1:].reshape(-1))

    emb = params["embedding"][padded_target]                          # (B, L, Emb)
    if concat_encoder_input:
        enc_exp = jnp.broadcast_to(encoder_out[:, None, :], (B, L, E))
        lstm_in = jnp.concatenate([enc_exp, emb], axis=2)             # (B, L, E+Emb)
    else:
        lstm_in = emb

    x = lstm_in[:, :T, :].astype(stream_dtype)                        # (B, T, In)

    # Hoisted input projection: one big MXU matmul with M = B*T, produced
    # time-major directly (no separate transpose pass).
    b_gates = (params["b_ih"] + params["b_hh"]).astype(jnp.float32)   # (4H,)
    xg_tm = jnp.einsum("bti,gi->tbg", x, params["w_ih"].astype(stream_dtype),
                       preferred_element_type=jnp.float32) + b_gates  # (T, B, 4H)
    xg_tm = xg_tm.astype(stream_dtype)

    # Hoisted initial-state projections.
    if init_state_context:
        h0 = (encoder_out @ params["w_init_h"].T + params["b_init_h"])
        c0 = (encoder_out @ params["w_init_c"].T + params["b_init_c"])
    else:
        h0 = jnp.zeros((B, H), jnp.float32)
        c0 = jnp.zeros((B, H), jnp.float32)
    h0 = h0.astype(jnp.float32)
    c0 = c0.astype(jnp.float32)

    lens_m1 = (target_lengths.astype(jnp.int32) - 1).reshape(B, 1)    # (B, 1)
    whh_t = params["w_hh"].T.astype(stream_dtype)                     # (H, 4H)

    # Pad the time axis to a multiple of the chunk so every grid block is full.
    num_chunks = pl.cdiv(T, time_chunk)
    T_pad = num_chunks * time_chunk
    if T_pad != T:
        xg_tm = jnp.pad(xg_tm, ((0, T_pad - T), (0, 0), (0, 0)))

    kernel = functools.partial(
        _lstm_recurrence_kernel,
        hidden_dim=H, time_chunk=time_chunk, unroll=unroll,
    )

    grid_spec = pltpu.PrefetchScalarGridSpec(
        num_scalar_prefetch=0,
        grid=(batch_blocks, num_chunks),   # (parallel batch, sequential time)
        in_specs=[
            pl.BlockSpec((Bb, 1), lambda b, t: (b, 0)),              # lens - 1
            pl.BlockSpec((Bb, H), lambda b, t: (b, 0)),              # h0
            pl.BlockSpec((Bb, H), lambda b, t: (b, 0)),              # c0
            pl.BlockSpec((H, 4 * H), lambda b, t: (0, 0)),           # W_hh^T
            pl.BlockSpec((time_chunk, Bb, 4 * H), lambda b, t: (t, b, 0)),  # xg
        ],
        out_specs=pl.BlockSpec((time_chunk, Bb, H), lambda b, t: (t, b, 0)),
        scratch_shapes=[
            pltpu.VMEM((Bb, H), jnp.float32),   # h state (f32 across chunks)
            pltpu.VMEM((Bb, H), jnp.float32),   # c state
        ],
    )

    # Explicit VMEM budget: ~2x double-buffered chunk tiles + residents + slack.
    bpe = jnp.dtype(stream_dtype).itemsize
    chunk_bytes = time_chunk * Bb * (4 * H + H) * bpe
    resident_bytes = H * 4 * H * bpe + 4 * Bb * H * 4 + Bb * 4
    vmem_limit = int(min(max(4 * (chunk_bytes + resident_bytes), 16 << 20), 64 << 20))

    h_tm = pl.pallas_call(
        kernel,
        out_shape=jax.ShapeDtypeStruct((T_pad, B, H), stream_dtype),
        grid_spec=grid_spec,
        compiler_params=pltpu.CompilerParams(
            dimension_semantics=("parallel", "arbitrary"),
            vmem_limit_bytes=vmem_limit,
        ),
    )(lens_m1, h0, c0, whh_t, xg_tm)

    h_tm = h_tm[:T]                                                   # drop pad

    # Hoisted vocab projection: one (B*T, H) x (H, V) matmul; the time-major ->
    # batch-major transpose is folded into the dot_general via einsum.
    pred = jnp.einsum("tbh,vh->btv", h_tm, params["w_out"].astype(stream_dtype),
                      preferred_element_type=jnp.float32)
    pred = pred + params["b_out"].astype(jnp.float32)
    predictions = pred.reshape(B * T, V)

    targets = padded_target[:, 1:].reshape(-1)
    return predictions, targets


# -----------------------------------------------------------------------------
# Pure-JAX reference for verification.
# -----------------------------------------------------------------------------
def reference_forward(params, encoder_out, padded_target, target_lengths):
    B, L = padded_target.shape
    H = params["w_hh"].shape[1]
    T = int(np.max(np.asarray(target_lengths))) - 1

    emb = params["embedding"][padded_target]
    enc_exp = jnp.broadcast_to(encoder_out[:, None, :],
                               (B, L, encoder_out.shape[1]))
    lstm_in = jnp.concatenate([enc_exp, emb], axis=2)

    h = encoder_out @ params["w_init_h"].T + params["b_init_h"]
    c = encoder_out @ params["w_init_c"].T + params["b_init_c"]

    outs = []
    for t in range(T):
        x = lstm_in[:, t, :]
        gates = (x @ params["w_ih"].T + params["b_ih"]
                 + h @ params["w_hh"].T + params["b_hh"])
        i_g = jax.nn.sigmoid(gates[:, 0 * H:1 * H])
        f_g = jax.nn.sigmoid(gates[:, 1 * H:2 * H])
        g_g = jnp.tanh(gates[:, 2 * H:3 * H])
        o_g = jax.nn.sigmoid(gates[:, 3 * H:4 * H])
        c_new = f_g * c + i_g * g_g
        h_new = o_g * jnp.tanh(c_new)
        valid = (t < (target_lengths - 1)).astype(jnp.float32)[:, None]
        h = valid * h_new + (1.0 - valid) * h
        c = valid * c_new + (1.0 - valid) * c
        outs.append(valid * h_new)
    out = jnp.stack(outs, axis=1)                                   # (B, T, H)
    pred = out.reshape(B * T, H) @ params["w_out"].T + params["b_out"]
    tgt = padded_target[:, 1:].reshape(-1)
    return pred, tgt


# -----------------------------------------------------------------------------
if __name__ == "__main__":
    # Small, deterministic configuration.
    B, L = 16, 8
    encoder_dim, embedding_dim, hidden_dim, vocab_size = 16, 16, 32, 40
    lstm_input_size = encoder_dim + embedding_dim

    key = jax.random.PRNGKey(0)
    ks = jax.random.split(key, 12)
    s = 0.1
    params = {
        "embedding": jax.random.normal(ks[0], (vocab_size, embedding_dim), jnp.float32) * s,
        "w_ih": jax.random.normal(ks[1], (4 * hidden_dim, lstm_input_size), jnp.float32) * s,
        "w_hh": jax.random.normal(ks[2], (4 * hidden_dim, hidden_dim), jnp.float32) * s,
        "b_ih": jax.random.normal(ks[3], (4 * hidden_dim,), jnp.float32) * s,
        "b_hh": jax.random.normal(ks[4], (4 * hidden_dim,), jnp.float32) * s,
        "w_init_h": jax.random.normal(ks[5], (hidden_dim, encoder_dim), jnp.float32) * s,
        "b_init_h": jax.random.normal(ks[6], (hidden_dim,), jnp.float32) * s,
        "w_init_c": jax.random.normal(ks[7], (hidden_dim, encoder_dim), jnp.float32) * s,
        "b_init_c": jax.random.normal(ks[8], (hidden_dim,), jnp.float32) * s,
        "w_out": jax.random.normal(ks[9], (vocab_size, hidden_dim), jnp.float32) * s,
        "b_out": jax.random.normal(ks[10], (vocab_size,), jnp.float32) * s,
    }

    encoder_out = jax.random.normal(ks[11], (B, encoder_dim), jnp.float32)
    target_lengths = jnp.array([8, 5, 3, 8, 6, 4, 7, 2,
                                8, 3, 5, 6, 2, 7, 4, 8], dtype=jnp.int32)  # max == L
    tokens = jax.random.randint(jax.random.PRNGKey(1), (B, L), 1, vocab_size)
    pos = jnp.arange(L)[None, :]
    padded_target = jnp.where(pos < target_lengths[:, None], tokens, 0).astype(jnp.int32)

    pred_ref, tgt_ref = reference_forward(params, encoder_out, padded_target, target_lengths)
    T = int(np.max(np.asarray(target_lengths))) - 1

    # --- strict f32 path: exact parity with the f32 reference ---------------
    pred_f32, tgt = lstm_decoder_forward(
        params, encoder_out, padded_target, target_lengths,
        concat_encoder_input=True, init_state_context=True,
        stream_dtype=jnp.float32, time_chunk=4, batch_blocks=2, unroll=4,
    )
    pred_f32 = jax.block_until_ready(pred_f32)
    np.testing.assert_allclose(np.asarray(pred_f32), np.asarray(pred_ref),
                               rtol=1e-5, atol=1e-5)
    np.testing.assert_array_equal(np.asarray(tgt), np.asarray(tgt_ref))

    # --- bf16 streamed path (the performance default) ------------------------
    pred_bf16, _ = lstm_decoder_forward(
        params, encoder_out, padded_target, target_lengths,
        concat_encoder_input=True, init_state_context=True,
        stream_dtype=jnp.bfloat16, time_chunk=4, batch_blocks=2, unroll=4,
    )
    pred_bf16 = jax.block_until_ready(pred_bf16)
    np.testing.assert_allclose(np.asarray(pred_bf16), np.asarray(pred_ref),
                               rtol=5e-2, atol=3e-2)

    assert pred_f32.shape == (B * T, vocab_size)
    assert tgt.shape == (B * (L - 1),)
    print("KERNEL_OK")
</pallas_src>

<mosaic_0001>
module attributes {stable_mosaic.version = 11 : i64} {
  func.func @_lstm_recurrence_kernel(%arg0: i32, %arg1: i32, %arg2: memref<8x1xi32, #tpu.memory_space<vmem>>, %arg3: memref<8x32xf32, #tpu.memory_space<vmem>>, %arg4: memref<8x32xf32, #tpu.memory_space<vmem>>, %arg5: memref<32x128xf32, #tpu.memory_space<vmem>>, %arg6: memref<4x8x128xf32, #tpu.memory_space<vmem>>, %arg7: memref<4x8x32xf32, #tpu.memory_space<vmem>>, %arg8: memref<8x32xf32, #tpu.memory_space<vmem>>, %arg9: memref<8x32xf32, #tpu.memory_space<vmem>>) attributes {dimension_semantics = [#tpu.dimension_semantics<parallel>, #tpu.dimension_semantics<arbitrary>], iteration_bounds = array<i64: 2, 2>, scalar_prefetch = 0 : i64, scratch_operands = 2 : i64, tpu.core_type = #tpu.core_type<tc>, window_params = [{transform_indices = @transform_0, window_bounds = array<i64: 8, 1>}, {transform_indices = @transform_1, window_bounds = array<i64: 8, 32>}, {transform_indices = @transform_2, window_bounds = array<i64: 8, 32>}, {pipeline_mode = #tpu.pipeline_mode<synchronous>, transform_indices = @transform_3, window_bounds = array<i64: 32, 128>}, {transform_indices = @transform_4, window_bounds = array<i64: 4, 8, 128>}, {transform_indices = @transform_5, window_bounds = array<i64: 4, 8, 32>}]} {
    %c0_i32 = arith.constant 0 : i32
    %0 = arith.cmpi eq, %arg1, %c0_i32 : i32
    %1 = arith.extui %0 : i1 to i32
    %c0_i32_0 = arith.constant 0 : i32
    %2 = arith.cmpi ne, %1, %c0_i32_0 : i32
    scf.if %2 {
      %c0_100 = arith.constant 0 : index
      %c0_101 = arith.constant 0 : index
      %237 = vector.load %arg3[%c0_100, %c0_101] : memref<8x32xf32, #tpu.memory_space<vmem>>, vector<8x32xf32>
      %c0_102 = arith.constant 0 : index
      %c0_103 = arith.constant 0 : index
      %238 = vector.load %arg8[%c0_102, %c0_103] : memref<8x32xf32, #tpu.memory_space<vmem>>, vector<8x32xf32>
      tpu.vector_store %arg8[%c0_102, %c0_103], %237 {strides = array<i32>} : memref<8x32xf32, #tpu.memory_space<vmem>>, vector<8x32xf32>,
      %c0_104 = arith.constant 0 : index
      %c0_105 = arith.constant 0 : index
      %239 = vector.load %arg4[%c0_104, %c0_105] : memref<8x32xf32, #tpu.memory_space<vmem>>, vector<8x32xf32>
      %c0_106 = arith.constant 0 : index
      %c0_107 = arith.constant 0 : index
      %240 = vector.load %arg9[%c0_106, %c0_107] : memref<8x32xf32, #tpu.memory_space<vmem>>, vector<8x32xf32>
      tpu.vector_store %arg9[%c0_106, %c0_107], %239 {strides = array<i32>} : memref<8x32xf32, #tpu.memory_space<vmem>>, vector<8x32xf32>,
    } else {
    }
    %c0 = arith.constant 0 : index
    %c0_1 = arith.constant 0 : index
    %3 = vector.load %arg5[%c0, %c0_1] : memref<32x128xf32, #tpu.memory_space<vmem>>, vector<32x128xf32>
    %c0_2 = arith.constant 0 : index
    %c0_3 = arith.constant 0 : index
    %4 = vector.load %arg2[%c0_2, %c0_3] : memref<8x1xi32, #tpu.memory_space<vmem>>, vector<8x1xi32>
    %c0_i32_4 = arith.constant 0 : i32
    %c0_5 = arith.constant 0 : index
    %c0_6 = arith.constant 0 : index
    %5 = vector.load %arg8[%c0_5, %c0_6] : memref<8x32xf32, #tpu.memory_space<vmem>>, vector<8x32xf32>
    %c0_7 = arith.constant 0 : index
    %c0_8 = arith.constant 0 : index
    %6 = vector.load %arg9[%c0_7, %c0_8] : memref<8x32xf32, #tpu.memory_space<vmem>>, vector<8x32xf32>
    %cst = arith.constant dense<0.000000e+00> : vector<8x128xf32>
    %7 = tpu.matmul %5, %3, %cst {dimension_numbers = #tpu.dot_dimension_numbers<[1], [0], [0], [1], [0, 0, 1, 1], [], []>} : vector<8x32xf32>, vector<32x128xf32>, vector<8x128xf32> -> vector<8x128xf32>
    %8 = arith.index_cast %c0_i32_4 : i32 to index
    %c0_9 = arith.constant 0 : index
    %c0_10 = arith.constant 0 : index
    %9 = vector.load %arg6[%8, %c0_9, %c0_10] : memref<4x8x128xf32, #tpu.memory_space<vmem>>, vector<1x8x128xf32>
    %10 = vector.shape_cast %9 : vector<1x8x128xf32> to vector<8x128xf32>
    %11 = arith.addf %10, %7 : vector<8x128xf32>
    %12 = vector.extract_strided_slice %11 {offsets = [0, 0], sizes = [8, 32], strides = [1, 1]} : vector<8x128xf32> to vector<8x32xf32>
    %cst_11 = arith.constant 5.000000e-01 : f32
    %13 = vector.broadcast %cst_11 : f32 to vector<8x32xf32>
    %14 = arith.mulf %13, %12 : vector<8x32xf32>
    %15 = math.tanh %14 : vector<8x32xf32>
    %cst_12 = arith.constant 1.000000e+00 : f32
    %16 = vector.broadcast %cst_12 : f32 to vector<8x32xf32>
    %17 = arith.addf %15, %16 : vector<8x32xf32>
    %cst_13 = arith.constant 5.000000e-01 : f32
    %18 = vector.broadcast %cst_13 : f32 to vector<8x32xf32>
    %19 = arith.mulf %18, %17 : vector<8x32xf32>
    %20 = vector.extract_strided_slice %11 {offsets = [0, 32], sizes = [8, 32], strides = [1, 1]} : vector<8x128xf32> to vector<8x32xf32>
    %cst_14 = arith.constant 5.000000e-01 : f32
    %21 = vector.broadcast %cst_14 : f32 to vector<8x32xf32>
    %22 = arith.mulf %21, %20 : vector<8x32xf32>
    %23 = math.tanh %22 : vector<8x32xf32>
    %cst_15 = arith.constant 1.000000e+00 : f32
    %24 = vector.broadcast %cst_15 : f32 to vector<8x32xf32>
    %25 = arith.addf %23, %24 : vector<8x32xf32>
    %cst_16 = arith.constant 5.000000e-01 : f32
    %26 = vector.broadcast %cst_16 : f32 to vector<8x32xf32>
    %27 = arith.mulf %26, %25 : vector<8x32xf32>
    %28 = vector.extract_strided_slice %11 {offsets = [0, 64], sizes = [8, 32], strides = [1, 1]} : vector<8x128xf32> to vector<8x32xf32>
    %29 = math.tanh %28 : vector<8x32xf32>
    %30 = vector.extract_strided_slice %11 {offsets = [0, 96], sizes = [8, 32], strides = [1, 1]} : vector<8x128xf32> to vector<8x32xf32>
    %cst_17 = arith.constant 5.000000e-01 : f32
    %31 = vector.broadcast %cst_17 : f32 to vector<8x32xf32>
    %32 = arith.mulf %31, %30 : vector<8x32xf32>
    %33 = math.tanh %32 : vector<8x32xf32>
    %cst_18 = arith.constant 1.000000e+00 : f32
    %34 = vector.broadcast %cst_18 : f32 to vector<8x32xf32>
    %35 = arith.addf %33, %34 : vector<8x32xf32>
    %cst_19 = arith.constant 5.000000e-01 : f32
    %36 = vector.broadcast %cst_19 : f32 to vector<8x32xf32>
    %37 = arith.mulf %36, %35 : vector<8x32xf32>
    %38 = arith.mulf %27, %6 : vector<8x32xf32>
    %39 = arith.mulf %19, %29 : vector<8x32xf32>
    %40 = arith.addf %38, %39 : vector<8x32xf32>
    %41 = math.tanh %40 : vector<8x32xf32>
    %42 = arith.mulf %37, %41 : vector<8x32xf32>
    %c4_i32 = arith.constant 4 : i32
    %43 = arith.muli %arg1, %c4_i32 : i32
    %44 = arith.addi %43, %c0_i32_4 : i32
    %45 = vector.broadcast %44 : i32 to vector<8x1xi32>
    %46 = arith.cmpi slt, %45, %4 : vector<8x1xi32>
    %47 = vector.shape_cast %46 : vector<8x1xi1> to vector<8x1xi1>
    %48 = vector.broadcast %47 : vector<8x1xi1> to vector<8x32xi1>
    %49 = arith.select %48, %42, %5 : vector<8x32xi1>, vector<8x32xf32>
    %c0_20 = arith.constant 0 : index
    %c0_21 = arith.constant 0 : index
    %50 = vector.load %arg8[%c0_20, %c0_21] : memref<8x32xf32, #tpu.memory_space<vmem>>, vector<8x32xf32>
    tpu.vector_store %arg8[%c0_20, %c0_21], %49 {strides = array<i32>} : memref<8x32xf32, #tpu.memory_space<vmem>>, vector<8x32xf32>,
    %51 = vector.shape_cast %46 : vector<8x1xi1> to vector<8x1xi1>
    %52 = vector.broadcast %51 : vector<8x1xi1> to vector<8x32xi1>
    %53 = arith.select %52, %40, %6 : vector<8x32xi1>, vector<8x32xf32>
    %c0_22 = arith.constant 0 : index
    %c0_23 = arith.constant 0 : index
    %54 = vector.load %arg9[%c0_22, %c0_23] : memref<8x32xf32, #tpu.memory_space<vmem>>, vector<8x32xf32>
    tpu.vector_store %arg9[%c0_22, %c0_23], %53 {strides = array<i32>} : memref<8x32xf32, #tpu.memory_space<vmem>>, vector<8x32xf32>,
    %cst_24 = arith.constant 0.000000e+00 : f32
    %55 = vector.shape_cast %46 : vector<8x1xi1> to vector<8x1xi1>
    %56 = vector.broadcast %55 : vector<8x1xi1> to vector<8x32xi1>
    %57 = vector.broadcast %cst_24 : f32 to vector<8x32xf32>
    %58 = arith.select %56, %42, %57 : vector<8x32xi1>, vector<8x32xf32>
    %59 = arith.index_cast %c0_i32_4 : i32 to index
    %c0_25 = arith.constant 0 : index
    %c0_26 = arith.constant 0 : index
    %60 = vector.load %arg7[%59, %c0_25, %c0_26] : memref<4x8x32xf32, #tpu.memory_space<vmem>>, vector<1x8x32xf32>
    %61 = vector.shape_cast %60 : vector<1x8x32xf32> to vector<8x32xf32>
    %62 = vector.shape_cast %58 : vector<8x32xf32> to vector<1x8x32xf32>
    tpu.vector_store %arg7[%59, %c0_25, %c0_26], %62 {strides = array<i32>} : memref<4x8x32xf32, #tpu.memory_space<vmem>>, vector<1x8x32xf32>,
    %c1_i32 = arith.constant 1 : i32
    %c0_27 = arith.constant 0 : index
    %c0_28 = arith.constant 0 : index
    %63 = vector.load %arg8[%c0_27, %c0_28] : memref<8x32xf32, #tpu.memory_space<vmem>>, vector<8x32xf32>
    %c0_29 = arith.constant 0 : index
    %c0_30 = arith.constant 0 : index
    %64 = vector.load %arg9[%c0_29, %c0_30] : memref<8x32xf32, #tpu.memory_space<vmem>>, vector<8x32xf32>
    %cst_31 = arith.constant dense<0.000000e+00> : vector<8x128xf32>
    %65 = tpu.matmul %63, %3, %cst_31 {dimension_numbers = #tpu.dot_dimension_numbers<[1], [0], [0], [1], [0, 0, 1, 1], [], []>} : vector<8x32xf32>, vector<32x128xf32>, vector<8x128xf32> -> vector<8x128xf32>
    %66 = arith.index_cast %c1_i32 : i32 to index
    %c0_32 = arith.constant 0 : index
    %c0_33 = arith.constant 0 : index
    %67 = vector.load %arg6[%66, %c0_32, %c0_33] : memref<4x8x128xf32, #tpu.memory_space<vmem>>, vector<1x8x128xf32>
    %68 = vector.shape_cast %67 : vector<1x8x128xf32> to vector<8x128xf32>
    %69 = arith.addf %68, %65 : vector<8x128xf32>
    %70 = vector.extract_strided_slice %69 {offsets = [0, 0], sizes = [8, 32], strides = [1, 1]} : vector<8x128xf32> to vector<8x32xf32>
    %cst_34 = arith.constant 5.000000e-01 : f32
    %71 = vector.broadcast %cst_34 : f32 to vector<8x32xf32>
    %72 = arith.mulf %71, %70 : vector<8x32xf32>
    %73 = math.tanh %72 : vector<8x32xf32>
    %cst_35 = arith.constant 1.000000e+00 : f32
    %74 = vector.broadcast %cst_35 : f32 to vector<8x32xf32>
    %75 = arith.addf %73, %74 : vector<8x32xf32>
    %cst_36 = arith.constant 5.000000e-01 : f32
    %76 = vector.broadcast %cst_36 : f32 to vector<8x32xf32>
    %77 = arith.mulf %76, %75 : vector<8x32xf32>
    %78 = vector.extract_strided_slice %69 {offsets = [0, 32], sizes = [8, 32], strides = [1, 1]} : vector<8x128xf32> to vector<8x32xf32>
    %cst_37 = arith.constant 5.000000e-01 : f32
    %79 = vector.broadcast %cst_37 : f32 to vector<8x32xf32>
    %80 = arith.mulf %79, %78 : vector<8x32xf32>
    %81 = math.tanh %80 : vector<8x32xf32>
    %cst_38 = arith.constant 1.000000e+00 : f32
    %82 = vector.broadcast %cst_38 : f32 to vector<8x32xf32>
    %83 = arith.addf %81, %82 : vector<8x32xf32>
    %cst_39 = arith.constant 5.000000e-01 : f32
    %84 = vector.broadcast %cst_39 : f32 to vector<8x32xf32>
    %85 = arith.mulf %84, %83 : vector<8x32xf32>
    %86 = vector.extract_strided_slice %69 {offsets = [0, 64], sizes = [8, 32], strides = [1, 1]} : vector<8x128xf32> to vector<8x32xf32>
    %87 = math.tanh %86 : vector<8x32xf32>
    %88 = vector.extract_strided_slice %69 {offsets = [0, 96], sizes = [8, 32], strides = [1, 1]} : vector<8x128xf32> to vector<8x32xf32>
    %cst_40 = arith.constant 5.000000e-01 : f32
    %89 = vector.broadcast %cst_40 : f32 to vector<8x32xf32>
    %90 = arith.mulf %89, %88 : vector<8x32xf32>
    %91 = math.tanh %90 : vector<8x32xf32>
    %cst_41 = arith.constant 1.000000e+00 : f32
    %92 = vector.broadcast %cst_41 : f32 to vector<8x32xf32>
    %93 = arith.addf %91, %92 : vector<8x32xf32>
    %cst_42 = arith.constant 5.000000e-01 : f32
    %94 = vector.broadcast %cst_42 : f32 to vector<8x32xf32>
    %95 = arith.mulf %94, %93 : vector<8x32xf32>
    %96 = arith.mulf %85, %64 : vector<8x32xf32>
    %97 = arith.mulf %77, %87 : vector<8x32xf32>
    %98 = arith.addf %96, %97 : vector<8x32xf32>
    %99 = math.tanh %98 : vector<8x32xf32>
    %100 = arith.mulf %95, %99 : vector<8x32xf32>
    %c4_i32_43 = arith.constant 4 : i32
    %101 = arith.muli %arg1, %c4_i32_43 : i32
    %102 = arith.addi %101, %c1_i32 : i32
    %103 = vector.broadcast %102 : i32 to vector<8x1xi32>
    %104 = arith.cmpi slt, %103, %4 : vector<8x1xi32>
    %105 = vector.shape_cast %104 : vector<8x1xi1> to vector<8x1xi1>
    %106 = vector.broadcast %105 : vector<8x1xi1> to vector<8x32xi1>
    %107 = arith.select %106, %100, %63 : vector<8x32xi1>, vector<8x32xf32>
    %c0_44 = arith.constant 0 : index
    %c0_45 = arith.constant 0 : index
    %108 = vector.load %arg8[%c0_44, %c0_45] : memref<8x32xf32, #tpu.memory_space<vmem>>, vector<8x32xf32>
    tpu.vector_store %arg8[%c0_44, %c0_45], %107 {strides = array<i32>} : memref<8x32xf32, #tpu.memory_space<vmem>>, vector<8x32xf32>,
    %109 = vector.shape_cast %104 : vector<8x1xi1> to vector<8x1xi1>
    %110 = vector.broadcast %109 : vector<8x1xi1> to vector<8x32xi1>
    %111 = arith.select %110, %98, %64 : vector<8x32xi1>, vector<8x32xf32>
    %c0_46 = arith.constant 0 : index
    %c0_47 = arith.constant 0 : index
    %112 = vector.load %arg9[%c0_46, %c0_47] : memref<8x32xf32, #tpu.memory_space<vmem>>, vector<8x32xf32>
    tpu.vector_store %arg9[%c0_46, %c0_47], %111 {strides = array<i32>} : memref<8x32xf32, #tpu.memory_space<vmem>>, vector<8x32xf32>,
    %cst_48 = arith.constant 0.000000e+00 : f32
    %113 = vector.shape_cast %104 : vector<8x1xi1> to vector<8x1xi1>
    %114 = vector.broadcast %113 : vector<8x1xi1> to vector<8x32xi1>
    %115 = vector.broadcast %cst_48 : f32 to vector<8x32xf32>
    %116 = arith.select %114, %100, %115 : vector<8x32xi1>, vector<8x32xf32>
    %117 = arith.index_cast %c1_i32 : i32 to index
    %c0_49 = arith.constant 0 : index
    %c0_50 = arith.constant 0 : index
    %118 = vector.load %arg7[%117, %c0_49, %c0_50] : memref<4x8x32xf32, #tpu.memory_space<vmem>>, vector<1x8x32xf32>
    %119 = vector.shape_cast %118 : vector<1x8x32xf32> to vector<8x32xf32>
    %120 = vector.shape_cast %116 : vector<8x32xf32> to vector<1x8x32xf32>
    tpu.vector_store %arg7[%117, %c0_49, %c0_50], %120 {strides = array<i32>} : memref<4x8x32xf32, #tpu.memory_space<vmem>>, vector<1x8x32xf32>,
    %c2_i32 = arith.constant 2 : i32
    %c0_51 = arith.constant 0 : index
    %c0_52 = arith.constant 0 : index
    %121 = vector.load %arg8[%c0_51, %c0_52] : memref<8x32xf32, #tpu.memory_space<vmem>>, vector<8x32xf32>
    %c0_53 = arith.constant 0 : index
    %c0_54 = arith.constant 0 : index
    %122 = vector.load %arg9[%c0_53, %c0_54] : memref<8x32xf32, #tpu.memory_space<vmem>>, vector<8x32xf32>
    %cst_55 = arith.constant dense<0.000000e+00> : vector<8x128xf32>
    %123 = tpu.matmul %121, %3, %cst_55 {dimension_numbers = #tpu.dot_dimension_numbers<[1], [0], [0], [1], [0, 0, 1, 1], [], []>} : vector<8x32xf32>, vector<32x128xf32>, vector<8x128xf32> -> vector<8x128xf32>
    %124 = arith.index_cast %c2_i32 : i32 to index
    %c0_56 = arith.constant 0 : index
    %c0_57 = arith.constant 0 : index
    %125 = vector.load %arg6[%124, %c0_56, %c0_57] : memref<4x8x128xf32, #tpu.memory_space<vmem>>, vector<1x8x128xf32>
    %126 = vector.shape_cast %125 : vector<1x8x128xf32> to vector<8x128xf32>
    %127 = arith.addf %126, %123 : vector<8x128xf32>
    %128 = vector.extract_strided_slice %127 {offsets = [0, 0], sizes = [8, 32], strides = [1, 1]} : vector<8x128xf32> to vector<8x32xf32>
    %cst_58 = arith.constant 5.000000e-01 : f32
    %129 = vector.broadcast %cst_58 : f32 to vector<8x32xf32>
    %130 = arith.mulf %129, %128 : vector<8x32xf32>
    %131 = math.tanh %130 : vector<8x32xf32>
    %cst_59 = arith.constant 1.000000e+00 : f32
    %132 = vector.broadcast %cst_59 : f32 to vector<8x32xf32>
    %133 = arith.addf %131, %132 : vector<8x32xf32>
    %cst_60 = arith.constant 5.000000e-01 : f32
    %134 = vector.broadcast %cst_60 : f32 to vector<8x32xf32>
    %135 = arith.mulf %134, %133 : vector<8x32xf32>
    %136 = vector.extract_strided_slice %127 {offsets = [0, 32], sizes = [8, 32], strides = [1, 1]} : vector<8x128xf32> to vector<8x32xf32>
    %cst_61 = arith.constant 5.000000e-01 : f32
    %137 = vector.broadcast %cst_61 : f32 to vector<8x32xf32>
    %138 = arith.mulf %137, %136 : vector<8x32xf32>
    %139 = math.tanh %138 : vector<8x32xf32>
    %cst_62 = arith.constant 1.000000e+00 : f32
    %140 = vector.broadcast %cst_62 : f32 to vector<8x32xf32>
    %141 = arith.addf %139, %140 : vector<8x32xf32>
    %cst_63 = arith.constant 5.000000e-01 : f32
    %142 = vector.broadcast %cst_63 : f32 to vector<8x32xf32>
    %143 = arith.mulf %142, %141 : vector<8x32xf32>
    %144 = vector.extract_strided_slice %127 {offsets = [0, 64], sizes = [8, 32], strides = [1, 1]} : vector<8x128xf32> to vector<8x32xf32>
    %145 = math.tanh %144 : vector<8x32xf32>
    %146 = vector.extract_strided_slice %127 {offsets = [0, 96], sizes = [8, 32], strides = [1, 1]} : vector<8x128xf32> to vector<8x32xf32>
    %cst_64 = arith.constant 5.000000e-01 : f32
    %147 = vector.broadcast %cst_64 : f32 to vector<8x32xf32>
    %148 = arith.mulf %147, %146 : vector<8x32xf32>
    %149 = math.tanh %148 : vector<8x32xf32>
    %cst_65 = arith.constant 1.000000e+00 : f32
    %150 = vector.broadcast %cst_65 : f32 to vector<8x32xf32>
    %151 = arith.addf %149, %150 : vector<8x32xf32>
    %cst_66 = arith.constant 5.000000e-01 : f32
    %152 = vector.broadcast %cst_66 : f32 to vector<8x32xf32>
    %153 = arith.mulf %152, %151 : vector<8x32xf32>
    %154 = arith.mulf %143, %122 : vector<8x32xf32>
    %155 = arith.mulf %135, %145 : vector<8x32xf32>
    %156 = arith.addf %154, %155 : vector<8x32xf32>
    %157 = math.tanh %156 : vector<8x32xf32>
    %158 = arith.mulf %153, %157 : vector<8x32xf32>
    %c4_i32_67 = arith.constant 4 : i32
    %159 = arith.muli %arg1, %c4_i32_67 : i32
    %160 = arith.addi %159, %c2_i32 : i32
    %161 = vector.broadcast %160 : i32 to vector<8x1xi32>
    %162 = arith.cmpi slt, %161, %4 : vector<8x1xi32>
    %163 = vector.shape_cast %162 : vector<8x1xi1> to vector<8x1xi1>
    %164 = vector.broadcast %163 : vector<8x1xi1> to vector<8x32xi1>
    %165 = arith.select %164, %158, %121 : vector<8x32xi1>, vector<8x32xf32>
    %c0_68 = arith.constant 0 : index
    %c0_69 = arith.constant 0 : index
    %166 = vector.load %arg8[%c0_68, %c0_69] : memref<8x32xf32, #tpu.memory_space<vmem>>, vector<8x32xf32>
    tpu.vector_store %arg8[%c0_68, %c0_69], %165 {strides = array<i32>} : memref<8x32xf32, #tpu.memory_space<vmem>>, vector<8x32xf32>,
    %167 = vector.shape_cast %162 : vector<8x1xi1> to vector<8x1xi1>
    %168 = vector.broadcast %167 : vector<8x1xi1> to vector<8x32xi1>
    %169 = arith.select %168, %156, %122 : vector<8x32xi1>, vector<8x32xf32>
    %c0_70 = arith.constant 0 : index
    %c0_71 = arith.constant 0 : index
    %170 = vector.load %arg9[%c0_70, %c0_71] : memref<8x32xf32, #tpu.memory_space<vmem>>, vector<8x32xf32>
    tpu.vector_store %arg9[%c0_70, %c0_71], %169 {strides = array<i32>} : memref<8x32xf32, #tpu.memory_space<vmem>>, vector<8x32xf32>,
    %cst_72 = arith.constant 0.000000e+00 : f32
    %171 = vector.shape_cast %162 : vector<8x1xi1> to vector<8x1xi1>
    %172 = vector.broadcast %171 : vector<8x1xi1> to vector<8x32xi1>
    %173 = vector.broadcast %cst_72 : f32 to vector<8x32xf32>
    %174 = arith.select %172, %158, %173 : vector<8x32xi1>, vector<8x32xf32>
    %175 = arith.index_cast %c2_i32 : i32 to index
    %c0_73 = arith.constant 0 : index
    %c0_74 = arith.constant 0 : index
    %176 = vector.load %arg7[%175, %c0_73, %c0_74] : memref<4x8x32xf32, #tpu.memory_space<vmem>>, vector<1x8x32xf32>
    %177 = vector.shape_cast %176 : vector<1x8x32xf32> to vector<8x32xf32>
    %178 = vector.shape_cast %174 : vector<8x32xf32> to vector<1x8x32xf32>
    tpu.vector_store %arg7[%175, %c0_73, %c0_74], %178 {strides = array<i32>} : memref<4x8x32xf32, #tpu.memory_space<vmem>>, vector<1x8x32xf32>,
    %c3_i32 = arith.constant 3 : i32
    %c0_75 = arith.constant 0 : index
    %c0_76 = arith.constant 0 : index
    %179 = vector.load %arg8[%c0_75, %c0_76] : memref<8x32xf32, #tpu.memory_space<vmem>>, vector<8x32xf32>
    %c0_77 = arith.constant 0 : index
    %c0_78 = arith.constant 0 : index
    %180 = vector.load %arg9[%c0_77, %c0_78] : memref<8x32xf32, #tpu.memory_space<vmem>>, vector<8x32xf32>
    %cst_79 = arith.constant dense<0.000000e+00> : vector<8x128xf32>
    %181 = tpu.matmul %179, %3, %cst_79 {dimension_numbers = #tpu.dot_dimension_numbers<[1], [0], [0], [1], [0, 0, 1, 1], [], []>} : vector<8x32xf32>, vector<32x128xf32>, vector<8x128xf32> -> vector<8x128xf32>
    %182 = arith.index_cast %c3_i32 : i32 to index
    %c0_80 = arith.constant 0 : index
    %c0_81 = arith.constant 0 : index
    %183 = vector.load %arg6[%182, %c0_80, %c0_81] : memref<4x8x128xf32, #tpu.memory_space<vmem>>, vector<1x8x128xf32>
    %184 = vector.shape_cast %183 : vector<1x8x128xf32> to vector<8x128xf32>
    %185 = arith.addf %184, %181 : vector<8x128xf32>
    %186 = vector.extract_strided_slice %185 {offsets = [0, 0], sizes = [8, 32], strides = [1, 1]} : vector<8x128xf32> to vector<8x32xf32>
    %cst_82 = arith.constant 5.000000e-01 : f32
    %187 = vector.broadcast %cst_82 : f32 to vector<8x32xf32>
    %188 = arith.mulf %187, %186 : vector<8x32xf32>
    %189 = math.tanh %188 : vector<8x32xf32>
    %cst_83 = arith.constant 1.000000e+00 : f32
    %190 = vector.broadcast %cst_83 : f32 to vector<8x32xf32>
    %191 = arith.addf %189, %190 : vector<8x32xf32>
    %cst_84 = arith.constant 5.000000e-01 : f32
    %192 = vector.broadcast %cst_84 : f32 to vector<8x32xf32>
    %193 = arith.mulf %192, %191 : vector<8x32xf32>
    %194 = vector.extract_strided_slice %185 {offsets = [0, 32], sizes = [8, 32], strides = [1, 1]} : vector<8x128xf32> to vector<8x32xf32>
    %cst_85 = arith.constant 5.000000e-01 : f32
    %195 = vector.broadcast %cst_85 : f32 to vector<8x32xf32>
    %196 = arith.mulf %195, %194 : vector<8x32xf32>
    %197 = math.tanh %196 : vector<8x32xf32>
    %cst_86 = arith.constant 1.000000e+00 : f32
    %198 = vector.broadcast %cst_86 : f32 to vector<8x32xf32>
    %199 = arith.addf %197, %198 : vector<8x32xf32>
    %cst_87 = arith.constant 5.000000e-01 : f32
    %200 = vector.broadcast %cst_87 : f32 to vector<8x32xf32>
    %201 = arith.mulf %200, %199 : vector<8x32xf32>
    %202 = vector.extract_strided_slice %185 {offsets = [0, 64], sizes = [8, 32], strides = [1, 1]} : vector<8x128xf32> to vector<8x32xf32>
    %203 = math.tanh %202 : vector<8x32xf32>
    %204 = vector.extract_strided_slice %185 {offsets = [0, 96], sizes = [8, 32], strides = [1, 1]} : vector<8x128xf32> to vector<8x32xf32>
    %cst_88 = arith.constant 5.000000e-01 : f32
    %205 = vector.broadcast %cst_88 : f32 to vector<8x32xf32>
    %206 = arith.mulf %205, %204 : vector<8x32xf32>
    %207 = math.tanh %206 : vector<8x32xf32>
    %cst_89 = arith.constant 1.000000e+00 : f32
    %208 = vector.broadcast %cst_89 : f32 to vector<8x32xf32>
    %209 = arith.addf %207, %208 : vector<8x32xf32>
    %cst_90 = arith.constant 5.000000e-01 : f32
    %210 = vector.broadcast %cst_90 : f32 to vector<8x32xf32>
    %211 = arith.mulf %210, %209 : vector<8x32xf32>
    %212 = arith.mulf %201, %180 : vector<8x32xf32>
    %213 = arith.mulf %193, %203 : vector<8x32xf32>
    %214 = arith.addf %212, %213 : vector<8x32xf32>
    %215 = math.tanh %214 : vector<8x32xf32>
    %216 = arith.mulf %211, %215 : vector<8x32xf32>
    %c4_i32_91 = arith.constant 4 : i32
    %217 = arith.muli %arg1, %c4_i32_91 : i32
    %218 = arith.addi %217, %c3_i32 : i32
    %219 = vector.broadcast %218 : i32 to vector<8x1xi32>
    %220 = arith.cmpi slt, %219, %4 : vector<8x1xi32>
    %221 = vector.shape_cast %220 : vector<8x1xi1> to vector<8x1xi1>
    %222 = vector.broadcast %221 : vector<8x1xi1> to vector<8x32xi1>
    %223 = arith.select %222, %216, %179 : vector<8x32xi1>, vector<8x32xf32>
    %c0_92 = arith.constant 0 : index
    %c0_93 = arith.constant 0 : index
    %224 = vector.load %arg8[%c0_92, %c0_93] : memref<8x32xf32, #tpu.memory_space<vmem>>, vector<8x32xf32>
    tpu.vector_store %arg8[%c0_92, %c0_93], %223 {strides = array<i32>} : memref<8x32xf32, #tpu.memory_space<vmem>>, vector<8x32xf32>,
    %225 = vector.shape_cast %220 : vector<8x1xi1> to vector<8x1xi1>
    %226 = vector.broadcast %225 : vector<8x1xi1> to vector<8x32xi1>
    %227 = arith.select %226, %214, %180 : vector<8x32xi1>, vector<8x32xf32>
    %c0_94 = arith.constant 0 : index
    %c0_95 = arith.constant 0 : index
    %228 = vector.load %arg9[%c0_94, %c0_95] : memref<8x32xf32, #tpu.memory_space<vmem>>, vector<8x32xf32>
    tpu.vector_store %arg9[%c0_94, %c0_95], %227 {strides = array<i32>} : memref<8x32xf32, #tpu.memory_space<vmem>>, vector<8x32xf32>,
    %cst_96 = arith.constant 0.000000e+00 : f32
    %229 = vector.shape_cast %220 : vector<8x1xi1> to vector<8x1xi1>
    %230 = vector.broadcast %229 : vector<8x1xi1> to vector<8x32xi1>
    %231 = vector.broadcast %cst_96 : f32 to vector<8x32xf32>
    %232 = arith.select %230, %216, %231 : vector<8x32xi1>, vector<8x32xf32>
    %233 = arith.index_cast %c3_i32 : i32 to index
    %c0_97 = arith.constant 0 : index
    %c0_98 = arith.constant 0 : index
    %234 = vector.load %arg7[%233, %c0_97, %c0_98] : memref<4x8x32xf32, #tpu.memory_space<vmem>>, vector<1x8x32xf32>
    %235 = vector.shape_cast %234 : vector<1x8x32xf32> to vector<8x32xf32>
    %236 = vector.shape_cast %232 : vector<8x32xf32> to vector<1x8x32xf32>
    tpu.vector_store %arg7[%233, %c0_97, %c0_98], %236 {strides = array<i32>} : memref<4x8x32xf32, #tpu.memory_space<vmem>>, vector<1x8x32xf32>,
    %c4_i32_99 = arith.constant 4 : i32
    return
  }
  func.func @transform_0(%arg0: i32, %arg1: i32) -> (i32, i32) {
    %c0_i32 = arith.constant 0 : i32
    %c0_i32_0 = arith.constant 0 : i32
    return %arg0, %c0_i32 : i32, i32
  }
  func.func @transform_1(%arg0: i32, %arg1: i32) -> (i32, i32) {
    %c0_i32 = arith.constant 0 : i32
    %c0_i32_0 = arith.constant 0 : i32
    return %arg0, %c0_i32 : i32, i32
  }
  func.func @transform_2(%arg0: i32, %arg1: i32) -> (i32, i32) {
    %c0_i32 = arith.constant 0 : i32
    %c0_i32_0 = arith.constant 0 : i32
    return %arg0, %c0_i32 : i32, i32
  }
  func.func @transform_3(%arg0: i32, %arg1: i32) -> (i32, i32) {
    %c0_i32 = arith.constant 0 : i32
    %c0_i32_0 = arith.constant 0 : i32
    %c0_i32_1 = arith.constant 0 : i32
    return %c0_i32, %c0_i32_0 : i32, i32
  }
  func.func @transform_4(%arg0: i32, %arg1: i32) -> (i32, i32, i32) {
    %c0_i32 = arith.constant 0 : i32
    %c0_i32_0 = arith.constant 0 : i32
    return %arg1, %arg0, %c0_i32 : i32, i32, i32
  }
  func.func @transform_5(%arg0: i32, %arg1: i32) -> (i32, i32, i32) {
    %c0_i32 = arith.constant 0 : i32
    %c0_i32_0 = arith.constant 0 : i32
    return %arg1, %arg0, %c0_i32 : i32, i32, i32
  }
}

</mosaic_0001>

<llo_original>
// kernel: tpu_custom_call.1
$region0: #{tpu_custom_call.1}
  #allocation0 [shape = 'u32[]', space=smem, size = 0x4, offset = 0x4, fixed_abs, tag = 'smem constant byte address 0x4 - core index']
  #allocation1 [shape = 'u32[144,128]{1,0:T(1,128)}', space=vmem, size = 0x12000, scoped, tag = 'internal scratch']
  #allocation2 [shape = 'f32[8,32]{1,0:T(8,128)}', space=vmem, size = 0x1000, scoped, tag = 'scratch operand']
  #allocation3 [shape = 'f32[8,32]{1,0:T(8,128)}', space=vmem, size = 0x1000, scoped, tag = 'scratch operand']
  %s0 = inlined_call_operand.vmem [shape: s32[16,1], index: 0, kind: input, shape index: {}]
  %s1 = inlined_call_operand.vmem [shape: f32[16,32], index: 1, kind: input, shape index: {}]
  %s2 = inlined_call_operand.hbm [shape: f32[16,32], index: 2, kind: input, shape index: {}]
  %s3 = inlined_call_operand.hbm [shape: f32[32,128], index: 3, kind: input, shape index: {}]
  %s4 = inlined_call_operand.hbm [shape: f32[8,16,128], index: 4, kind: input, shape index: {}]
  %s5 = inlined_call_operand.hbm [shape: f32[8,16,32], index: 5, kind: output, shape index: {}]
  %s6 = sld [smem:[#allocation0]]
  $region69: #{tpu_custom_call.1} parent=0
    _
  %s8 = ssub.s32 1, %s6
  %s9 = scalar_select 0, %s8, %s6
  $region1: #{tpu_custom_call.1} parent=0
    #allocation4 [shape = 'u8[8192]{0}', space=vmem, size = 0x2000, scoped, tag = 'input window, operand 2']
    #allocation5 [shape = 's32[2]{0}', space=sflag, size = 0x8, scoped, tag = 'scoped memory for tpu_custom_call.1']
    #allocation6 [shape = 's32[2]{0}', space=sflag, size = 0x8, scoped, tag = 'scoped memory for tpu_custom_call.1']
    #allocation7 [shape = 'u8[16384]{0}', space=vmem, size = 0x4000, scoped, tag = 'input window, operand 3, single buffered']
    #allocation8 [shape = 's32[1]{0}', space=sflag, size = 0x4, scoped, tag = 'scoped memory for tpu_custom_call.1']
    #allocation9 [shape = 'u8[32768]{0}', space=vmem, size = 0x8000, scoped, tag = 'input window, operand 4']
    #allocation10 [shape = 'u8[32768]{0}', space=vmem, size = 0x8000, scoped, tag = 'output window, operand 0']
    %10 = vsyncpa [#allocation5], 0
    %s11 = scalar_lea.sflag [#allocation5], 1
    %12 = vsyncpa %s11, 0
    %13 = vsyncpa [#allocation8], 0
    %14 = vsyncpa [#allocation6], 0
    %s15 = scalar_lea.sflag [#allocation6], 1
    %16 = vsyncpa %s15, 0
    loop: start=0, step=1, limit=6
    $region2: #{tpu_custom_call.1} parent=1 // loop_pre_header
      _
    $region3: #{tpu_custom_call.1} parent=1 // loop_header
      %s18 = sphi 0, %s22
      %p19 = scmp.ge.s32.totalorder %s18, 6
      %s25 = sphi 0, %s37
      %s26 = sphi 0, %s33
      %s27 = sphi 0, %s25
      %s28 = sphi 0, %s26
      %s29 = sphi 0, %s27
      %s30 = sphi 0, %s28
      %s40 = sphi 0, %s42
      %s43 = sphi 0, %s40
      %s44 = sphi 0, %s43
      %s60 = sphi 0, %s44
      %s66 = sphi 0, %s68
      %s69 = sphi 0, %s66
      %s70 = sphi 0, %s69
      %s86 = sphi 0, %s70
      %s92 = sphi 0, %s94
      %s95 = sphi 0, %s92
      %s96 = sphi 0, %s95
      %s112 = sphi 0, %s96
      %s116 = sphi 0, %s116
      %s118 = sphi 0, %s116
      %s119 = sphi 0, %s118
      %s133 = sphi 0, %s119
      %s141 = sphi 0, %s143
      %s144 = sphi 0, %s141
      %s145 = sphi 0, %s144
      %s161 = sphi 0, %s145
      %s169 = sphi 0, %s171
      %s172 = sphi 0, %s169
      %s173 = sphi 0, %s172
      %s189 = sphi 0, %s173
    $region4: #{tpu_custom_call.1} parent=1 // loop_header_branch
      %21 = sbr.rel (%p19) target = $region8
    $region5: #{tpu_custom_call.1} parent=1 // loop_body
      %s23 = ssub.s32 %s18, 1
      %s24 = ssub.s32 %s18, 2
      %s31 = sadd.s32 1, %s26
      %p32 = scmp.ge.s32.totalorder %s31, 2
      %s33 = scalar_select %p32, 0, %s31
      %s34 = sadd.s32 1, %s25
      %s35 = scalar_select %p32, %s34, %s25
      %p36 = scmp.ge.s32.totalorder %s35, 2
      %s37 = scalar_select %p36, 0, %s35
      %s38 = ssub.s32 %s25, %s37
      %p39 = scmp.eq.s32.totalorder %s38, 0
      %s41 = sadd.s32 %s40, 1
      %s42 = scalar_select %p39, %s40, %s41
      %p45 = pneg %p39
      %p46 = scmp.eq.s32.totalorder %s18, 3
      %p47 = por %p45, %p46
      %p48 = scmp.ne.s32.totalorder %s40, %s43
      %p49 = scmp.eq.s32.totalorder %s18, 0
      %p50 = por %p48, %p49
      %p51 = scmp.ne.s32.totalorder %s40, %s43
      %p52 = scmp.eq.s32.totalorder %s23, 3
      %p53 = por %p51, %p52
      %p54 = scmp.ne.s32.totalorder %s43, %s44
      %p55 = scmp.eq.s32.totalorder %s23, 0
      %p56 = por %p54, %p55
      %p57 = scmp.ne.s32.totalorder %s43, %s44
      %p58 = scmp.eq.s32.totalorder %s24, 3
      %p59 = por %p57, %p58
      %p61 = scmp.ne.s32.totalorder %s44, %s60
      %p62 = scmp.eq.s32.totalorder %s24, 0
      %p63 = por %p61, %p62
      %s64 = ssub.s32 %s25, %s37
      %p65 = scmp.eq.s32.totalorder %s64, 0
      %s67 = sadd.s32 %s66, 1
      %s68 = scalar_select %p65, %s66, %s67
      %p71 = pneg %p65
      %p72 = scmp.eq.s32.totalorder %s18, 3
      %p73 = por %p71, %p72
      %p74 = scmp.ne.s32.totalorder %s66, %s69
      %p75 = scmp.eq.s32.totalorder %s18, 0
      %p76 = por %p74, %p75
      %p77 = scmp.ne.s32.totalorder %s66, %s69
      %p78 = scmp.eq.s32.totalorder %s23, 3
      %p79 = por %p77, %p78
      %p80 = scmp.ne.s32.totalorder %s69, %s70
      %p81 = scmp.eq.s32.totalorder %s23, 0
      %p82 = por %p80, %p81
      %p83 = scmp.ne.s32.totalorder %s69, %s70
      %p84 = scmp.eq.s32.totalorder %s24, 3
      %p85 = por %p83, %p84
      %p87 = scmp.ne.s32.totalorder %s70, %s86
      %p88 = scmp.eq.s32.totalorder %s24, 0
      %p89 = por %p87, %p88
      %s90 = ssub.s32 %s25, %s37
      %p91 = scmp.eq.s32.totalorder %s90, 0
      %s93 = sadd.s32 %s92, 1
      %s94 = scalar_select %p91, %s92, %s93
      %p97 = pneg %p91
      %p98 = scmp.eq.s32.totalorder %s18, 3
      %p99 = por %p97, %p98
      %p100 = scmp.ne.s32.totalorder %s92, %s95
      %p101 = scmp.eq.s32.totalorder %s18, 0
      %p102 = por %p100, %p101
      %p103 = scmp.ne.s32.totalorder %s92, %s95
      %p104 = scmp.eq.s32.totalorder %s23, 3
      %p105 = por %p103, %p104
      %p106 = scmp.ne.s32.totalorder %s95, %s96
      %p107 = scmp.eq.s32.totalorder %s23, 0
      %p108 = por %p106, %p107
      %p109 = scmp.ne.s32.totalorder %s95, %s96
      %p110 = scmp.eq.s32.totalorder %s24, 3
      %p111 = por %p109, %p110
      %p113 = scmp.ne.s32.totalorder %s96, %s112
      %p114 = scmp.eq.s32.totalorder %s24, 0
      %p115 = por %p113, %p114
      %s117 = sadd.s32 %s116, 1
      %p120 = scmp.eq.s32.totalorder %s18, 3
      %p121 = scmp.ne.s32.totalorder %s116, %s118
      %p122 = scmp.eq.s32.totalorder %s18, 0
      %p123 = por %p121, %p122
      %p124 = scmp.ne.s32.totalorder %s116, %s118
      %p125 = scmp.eq.s32.totalorder %s23, 3
      %p126 = por %p124, %p125
      %p127 = scmp.ne.s32.totalorder %s118, %s119
      %p128 = scmp.eq.s32.totalorder %s23, 0
      %p129 = por %p127, %p128
      %p130 = scmp.ne.s32.totalorder %s118, %s119
      %p131 = scmp.eq.s32.totalorder %s24, 3
      %p132 = por %p130, %p131
      %p134 = scmp.ne.s32.totalorder %s119, %s133
      %p135 = scmp.eq.s32.totalorder %s24, 0
      %p136 = por %p134, %p135
      %s137 = ssub.s32 %s26, %s33
      %s138 = ssub.s32 %s25, %s37
      %s139 = sor.u32 %s137, %s138
      %p140 = scmp.eq.s32.totalorder %s139, 0
      %s142 = sadd.s32 %s141, 1
      %s143 = scalar_select %p140, %s141, %s142
      %p146 = pneg %p140
      %p147 = scmp.eq.s32.totalorder %s18, 3
      %p148 = por %p146, %p147
      %p149 = scmp.ne.s32.totalorder %s141, %s144
      %p150 = scmp.eq.s32.totalorder %s18, 0
      %p151 = por %p149, %p150
      %p152 = scmp.ne.s32.totalorder %s141, %s144
      %p153 = scmp.eq.s32.totalorder %s23, 3
      %p154 = por %p152, %p153
      %p155 = scmp.ne.s32.totalorder %s144, %s145
      %p156 = scmp.eq.s32.totalorder %s23, 0
      %p157 = por %p155, %p156
      %p158 = scmp.ne.s32.totalorder %s144, %s145
      %p159 = scmp.eq.s32.totalorder %s24, 3
      %p160 = por %p158, %p159
      %p162 = scmp.ne.s32.totalorder %s145, %s161
      %p163 = scmp.eq.s32.totalorder %s24, 0
      %p164 = por %p162, %p163
      %s165 = ssub.s32 %s26, %s33
      %s166 = ssub.s32 %s25, %s37
      %s167 = sor.u32 %s165, %s166
      %p168 = scmp.eq.s32.totalorder %s167, 0
      %s170 = sadd.s32 %s169, 1
      %s171 = scalar_select %p168, %s169, %s170
      %p174 = pneg %p168
      %p175 = scmp.eq.s32.totalorder %s18, 3
      %p176 = por %p174, %p175
      %p177 = scmp.ne.s32.totalorder %s169, %s172
      %p178 = scmp.eq.s32.totalorder %s18, 0
      %p179 = por %p177, %p178
      %p180 = scmp.ne.s32.totalorder %s169, %s172
      %p181 = scmp.eq.s32.totalorder %s23, 3
      %p182 = por %p180, %p181
      %p183 = scmp.ne.s32.totalorder %s172, %s173
      %p184 = scmp.eq.s32.totalorder %s23, 0
      %p185 = por %p183, %p184
      %p186 = scmp.ne.s32.totalorder %s172, %s173
      %p187 = scmp.eq.s32.totalorder %s24, 3
      %p188 = por %p186, %p187
      %p190 = scmp.ne.s32.totalorder %s173, %s189
      %p191 = scmp.eq.s32.totalorder %s24, 0
      %p192 = por %p190, %p191
      %p193 = scmp.le.s32.totalorder 1, %s18
      %p194 = scmp.lt.s32.totalorder %s18, 5
      %p195 = pnand %p193, %p194
      %p196 = pneg %p195
      // Predicated region
      $region9: #{tpu_custom_call.1} parent=5 // pred_check
        _
      $region10: #{tpu_custom_call.1} parent=5 // pred_check_branch
        %198 = sbr.rel (%p195) target = $region12
      $region11: #{tpu_custom_call.1} parent=5 // pred_region
        %s199 = ssub.s32 %s18, 1
        // Predicated region
        $region13: #{tpu_custom_call.1} parent=11 // pred_check
          %p200 = pneg %p129
        $region14: #{tpu_custom_call.1} parent=11 // pred_check_branch
          %202 = sbr.rel (%p200) target = $region16
        $region15: #{tpu_custom_call.1} parent=11 // pred_region
          %s204 = ssub.s32 512, 512
          %205 = vsyncadd [#allocation8], %s204
          %s206 = sshll.u32 [#allocation7], 4
          %s207 = int_to_ptr.vmem [resolvable:$true] %s206
          %212 = dma.hbm_to_vmem [thread:$0]  %s3, 512, %s207, [#allocation8], 128, 128, 8
        $region16: #{tpu_custom_call.1} parent=11 // pred_fallthru
          _
      $region12: #{tpu_custom_call.1} parent=5 // pred_fallthru
        _
      %p213 = scmp.lt.s32.totalorder %s18, 4
      // Predicated region
      $region17: #{tpu_custom_call.1} parent=5 // pred_check
        %p214 = pneg %p213
      $region18: #{tpu_custom_call.1} parent=5 // pred_check_branch
        %216 = sbr.rel (%p214) target = $region20
      $region19: #{tpu_custom_call.1} parent=5 // pred_region
        // Predicated region
        $region21: #{tpu_custom_call.1} parent=19 // pred_check
          %p217 = pneg %p50
        $region22: #{tpu_custom_call.1} parent=19 // pred_check_branch
          %219 = sbr.rel (%p217) target = $region24
        $region23: #{tpu_custom_call.1} parent=19 // pred_region
          %p220 = scmp.lt.s32.totalorder %s25, 1
          %s221 = scalar_select %p220, %s25, 1
          %s222 = smul.addr %s221, 8
          %s223 = scalar_lea.vmem %s0, %s222
        $region24: #{tpu_custom_call.1} parent=19 // pred_fallthru
          _
        // Predicated region
        $region25: #{tpu_custom_call.1} parent=19 // pred_check
          %p224 = pneg %p76
        $region26: #{tpu_custom_call.1} parent=19 // pred_check_branch
          %226 = sbr.rel (%p224) target = $region28
        $region27: #{tpu_custom_call.1} parent=19 // pred_region
          %p227 = scmp.lt.s32.totalorder %s25, 1
          %s228 = scalar_select %p227, %s25, 1
          %s229 = smul.addr %s228, 8
          %s230 = scalar_lea.vmem %s1, %s229
        $region28: #{tpu_custom_call.1} parent=19 // pred_fallthru
          _
        // Predicated region
        $region29: #{tpu_custom_call.1} parent=19 // pred_check
          %p231 = pneg %p102
        $region30: #{tpu_custom_call.1} parent=19 // pred_check_branch
          %233 = sbr.rel (%p231) target = $region32
        $region31: #{tpu_custom_call.1} parent=19 // pred_region
          %s234 = sand.u32 %s18, 1
          %s235 = scalar_lea.sflag [#allocation5], %s234
          %s236 = sand.u32 %s92, 1
          %s237 = smul.addr %s236, 8
          %s238 = scalar_lea.vmem [#allocation4], %s237
          %s240 = ssub.s32 128, 128
          %241 = vsyncadd %s235, %s240
          %s242 = smul.addr %s25, 128
          %s243 = scalar_lea.hbm %s2, %s242
          %s245 = sshll.u32 %s238, 4
          %s246 = int_to_ptr.vmem [resolvable:$true] %s245
          %248 = dma.hbm_to_vmem [thread:$0]  %s243, 128, %s246, %s235
        $region32: #{tpu_custom_call.1} parent=19 // pred_fallthru
          _
        // Predicated region
        $region33: #{tpu_custom_call.1} parent=19 // pred_check
          %p249 = pneg %p151
        $region34: #{tpu_custom_call.1} parent=19 // pred_check_branch
          %251 = sbr.rel (%p249) target = $region36
        $region35: #{tpu_custom_call.1} parent=19 // pred_region
          %s252 = sand.u32 %s18, 1
          %s253 = scalar_lea.sflag [#allocation5], %s252
          %s254 = sand.u32 %s141, 1
          %s255 = smul.addr %s254, 32
          %s256 = scalar_lea.vmem [#allocation9], %s255
          %s257 = smul.u32 4, %s26
          %s259 = ssub.s32 512, 512
          %260 = vsyncadd %s253, %s259
          %s261 = smul.addr %s257, 2
          %s262 = sadd.s32 %s25, %s261
          %s263 = smul.addr %s262, 128
          %s264 = scalar_lea.hbm %s4, %s263
          %s265 = sshll.u32 %s256, 4
          %s266 = int_to_ptr.vmem [resolvable:$true] %s265
          %271 = dma.hbm_to_vmem [thread:$0]  %s264, 512, %s266, %s253, 256, 128, 8
        $region36: #{tpu_custom_call.1} parent=19 // pred_fallthru
          _
      $region20: #{tpu_custom_call.1} parent=5 // pred_fallthru
        _
      %p272 = scmp.le.s32.totalorder 1, %s18
      %p273 = scmp.lt.s32.totalorder %s18, 5
      %p274 = pnand %p272, %p273
      %p275 = pneg %p274
      // Predicated region
      $region37: #{tpu_custom_call.1} parent=5 // pred_check
        _
      $region38: #{tpu_custom_call.1} parent=5 // pred_check_branch
        %277 = sbr.rel (%p274) target = $region40
      $region39: #{tpu_custom_call.1} parent=5 // pred_region
        %s278 = ssub.s32 %s18, 1
        %s279 = sand.u32 %s23, 1
        %s280 = scalar_lea.sflag [#allocation5], %s279
        %s281 = sand.u32 %s95, 1
        %s282 = smul.addr %s281, 8
        %s283 = scalar_lea.vmem [#allocation4], %s282
        // Predicated region
        $region41: #{tpu_custom_call.1} parent=39 // pred_check
          %p284 = pneg %p108
        $region42: #{tpu_custom_call.1} parent=39 // pred_check_branch
          %286 = sbr.rel (%p284) target = $region44
        $region43: #{tpu_custom_call.1} parent=39 // pred_region
          %287 = dma.done %s280, 128
        $region44: #{tpu_custom_call.1} parent=39 // pred_fallthru
          _
        // Predicated region
        $region45: #{tpu_custom_call.1} parent=39 // pred_check
          %p288 = pneg %p129
        $region46: #{tpu_custom_call.1} parent=39 // pred_check_branch
          %290 = sbr.rel (%p288) target = $region48
        $region47: #{tpu_custom_call.1} parent=39 // pred_region
          %291 = dma.done [#allocation8], 512
        $region48: #{tpu_custom_call.1} parent=39 // pred_fallthru
          _
        %s292 = sand.u32 %s23, 1
        %s293 = scalar_lea.sflag [#allocation5], %s292
        %s294 = sand.u32 %s144, 1
        %s295 = smul.addr %s294, 32
        %s296 = scalar_lea.vmem [#allocation9], %s295
        // Predicated region
        $region49: #{tpu_custom_call.1} parent=39 // pred_check
          %p297 = pneg %p157
        $region50: #{tpu_custom_call.1} parent=39 // pred_check_branch
          %299 = sbr.rel (%p297) target = $region52
        $region51: #{tpu_custom_call.1} parent=39 // pred_region
          %300 = dma.done %s293, 512
        $region52: #{tpu_custom_call.1} parent=39 // pred_fallthru
          _
        %p301 = scmp.lt.s32.totalorder %s27, 1
        %s302 = scalar_select %p301, %s27, 1
        %s303 = smul.addr %s302, 8
        %s304 = scalar_lea.vmem %s0, %s303
        %p305 = pneg %p56
        %p306 = pneg %p53
        %p307 = scmp.lt.s32.totalorder %s27, 1
        %s308 = scalar_select %p307, %s27, 1
        %s309 = smul.addr %s308, 8
        %s310 = scalar_lea.vmem %s1, %s309
        %p311 = pneg %p82
        %p312 = pneg %p79
        %s313 = sand.u32 %s23, 1
        %s314 = scalar_lea.sflag [#allocation5], %s313
        %s315 = sand.u32 %s95, 1
        %s316 = smul.addr %s315, 8
        %s317 = scalar_lea.vmem [#allocation4], %s316
        %p318 = pneg %p108
        %p319 = pneg %p105
        %p320 = pneg %p129
        %p321 = pneg %p126
        %s322 = sand.u32 %s23, 1
        %s323 = scalar_lea.sflag [#allocation5], %s322
        %s324 = sand.u32 %s144, 1
        %s325 = smul.addr %s324, 32
        %s326 = scalar_lea.vmem [#allocation9], %s325
        %p327 = pneg %p157
        %p328 = pneg %p154
        %p329 = pneg %p185
        %p330 = pneg %p182
        %s331 = sand.u32 %s172, 1
        %s332 = scalar_lea.sflag [#allocation6], %s331
        %s333 = sand.u32 %s172, 1
        %s334 = smul.addr %s333, 32
        %s335 = scalar_lea.vmem [#allocation10], %s334
        %p336 = scmp.lt.s32.totalorder %s27, 1
        %s337 = scalar_select %p336, %s27, 1
        %s338 = smul.addr %s337, 8
        %s339 = scalar_lea.vmem %s0, %s338
        %p340 = scmp.lt.s32.totalorder %s27, 1
        %s341 = scalar_select %p340, %s27, 1
        %s342 = smul.addr %s341, 8
        %s343 = scalar_lea.vmem %s1, %s342
        %s344 = smul.u32 4, %s28
        %s345 = smul.u32 4, %s28
        %p346 = scmp.eq.s32.totalorder %s28, 0
        // Predicated region
        $region53: #{tpu_custom_call.1} parent=39 // pred_check
          %p347 = pneg %p346
        $region54: #{tpu_custom_call.1} parent=39 // pred_check_branch
          %349 = sbr.rel (%p347) target = $region56
        $region55: #{tpu_custom_call.1} parent=39 // pred_region
          %v350 = vld [vmem:[%s343] sm:$0xff]
          %vm351 = vcmask 261120
          %352 = vst.msk [vmem:[#allocation2] sm:$0xff] %vm351, %v350
          %v353 = vld [vmem:[%s283] sm:$0xff]
          %354 = vst.msk [vmem:[#allocation3] sm:$0xff] %vm351, %v353
        $region56: #{tpu_custom_call.1} parent=39 // pred_fallthru
          _
        %v355 = vld [vmem:[#allocation7] sm:$0xff]
        %v356 = vld [vmem:[#allocation7 + $0x8] sm:$0xff]
        %v357 = vld [vmem:[#allocation7 + $0x10] sm:$0xff]
        %v358 = vld [vmem:[#allocation7 + $0x18] sm:$0xff]
        %v359 = vld [vmem:[%s339] sm:$0xff]
        %v360 = vld [vmem:[#allocation2] sm:$0xff]
        %v361 = vld [vmem:[#allocation3] sm:$0xff]
        %vm362 = vcmask 261120
        %v364 = vsel %vm362, %v360, 0
        %366 = vmatprep.subr.mxu0 0.0
        %367 = vmatpush1.msra.mxu0 %v355
        %368 = vmatprep.subr.mxu0 0.0
        %369 = vmatpush1.msra.mxu0 %v356
        %370 = vmatprep.subr.mxu0 0.0
        %371 = vmatpush1.msra.mxu0 %v357
        %372 = vmatprep.subr.mxu0 0.0
        %373 = vmatpush1.msra.mxu0 %v358
        %374 = vmatprep.subr.mxu0 0.0
        %375 = vmatpush1.msra.mxu0 0.0
        %376 = vmatprep.subr.mxu0 0.0
        %377 = vmatpush1.msra.mxu0 0.0
        %378 = vmatprep.subr.mxu0 0.0
        %379 = vmatpush1.msra.mxu0 0.0
        %380 = vmatprep.subr.mxu0 0.0
        %381 = vmatpush1.msra.mxu0 0.0
        %382 = vmatprep.subr.mxu0 0.0
        %383 = vmatpush1.msra.mxu0 0.0
        %384 = vmatprep.subr.mxu0 0.0
        %385 = vmatpush1.msra.mxu0 0.0
        %386 = vmatprep.subr.mxu0 0.0
        %387 = vmatpush1.msra.mxu0 0.0
        %388 = vmatprep.subr.mxu0 0.0
        %389 = vmatpush1.msra.mxu0 0.0
        %390 = vmatprep.subr.mxu0 0.0
        %391 = vmatpush1.msra.mxu0 0.0
        %392 = vmatprep.subr.mxu0 0.0
        %393 = vmatpush1.msra.mxu0 0.0
        %394 = vmatprep.subr.mxu0 0.0
        %395 = vmatpush1.msra.mxu0 0.0
        %396 = vmatprep.subr.mxu0 0.0
        %397 = vmatpush1.msra.mxu0 0.0
        %398 = vmatprep.subr.mxu0 0.0
        %399 = vmatpush1.msra.mxu0 0.0
        %400 = vmatprep.subr.mxu0 0.0
        %401 = vmatpush1.msra.mxu0 0.0
        %402 = vmatprep.subr.mxu0 0.0
        %403 = vmatpush1.msra.mxu0 0.0
        %404 = vmatprep.subr.mxu0 0.0
        %405 = vmatpush1.msra.mxu0 0.0
        %406 = vmatprep.subr.mxu0 0.0
        %407 = vmatpush1.msra.mxu0 0.0
        %408 = vmatprep.subr.mxu0 0.0
        %409 = vmatpush1.msra.mxu0 0.0
        %410 = vmatprep.subr.mxu0 0.0
        %411 = vmatpush1.msra.mxu0 0.0
        %412 = vmatprep.subr.mxu0 0.0
        %413 = vmatpush1.msra.mxu0 0.0
        %414 = vmatprep.subr.mxu0 0.0
        %415 = vmatpush1.msra.mxu0 0.0
        %416 = vmatprep.subr.mxu0 0.0
        %417 = vmatpush1.msra.mxu0 0.0
        %418 = vmatprep.subr.mxu0 0.0
        %419 = vmatpush1.msra.mxu0 0.0
        %420 = vmatprep.subr.mxu0 0.0
        %421 = vmatpush1.msra.mxu0 0.0
        %422 = vmatprep.subr.mxu0 0.0
        %423 = vmatpush1.msra.mxu0 0.0
        %424 = vmatprep.subr.mxu0 0.0
        %425 = vmatpush1.msra.mxu0 0.0
        %426 = vmatprep.subr.mxu0 0.0
        %427 = vmatpush1.msra.mxu0 0.0
        %428 = vmatprep.subr.mxu0 0.0
        %429 = vmatpush1.msra.mxu0 0.0
        %430 = vmatprep.mubr.f32.mxu0 0.0
        %431 = vmatmul.mubr.f32.gmra.mrb[0].mxu0 %v364
        %v432 = vpop.f32.mrb[0].mxu0
        %v433 = vadd.f32 0.0, %v432
        %v434 = vpop.f32.mrb[0].mxu0
        %435 = vdwg.mxu0
        %v436 = vld [vmem:[%s296] sm:$0xff]
        %v437 = vadd.f32 %v436, %v433
        %v438 = vmul.f32 %v437, 0.5
        %v439 = vtanh.pop %v438
        %v440 = vadd.f32 %v439, 1.0
        %v441 = vmul.f32 %v440, 0.5
        %v442 = vtanh.pop %v437
        %444 = vrot.lane.b32.xlu0 %v361, 32
        %v445 = vpop.permute.xlu0 %444
        %v447 = vmul.f32 %v441, %v445
        %449 = vrot.lane.b32.xlu0 %v442, 64
        %v450 = vpop.permute.xlu0 %449
        %v452 = vmul.f32 %v441, %v450
        %454 = vrot.lane.b32.xlu0 %v452, 32
        %v455 = vpop.permute.xlu0 %454
        %v457 = vadd.f32 %v447, %v455
        %v458 = vtanh.pop %v457
        %460 = vrot.lane.b32.xlu0 %v458, 64
        %v461 = vpop.permute.xlu0 %460
        %v463 = vmul.f32 %v441, %v461
        %s464 = smul.u32 %s28, 4
        %v465 = vstv %s464
        %vm466 = vcmp.lt.s32.totalorder %v465, %v359
        %v467 = vsel %vm466, 1, 0
        %468 = vset.pattern.permute.xlu0 0
        %469 = vperm.xlu0 %468, %v467
        %v470 = vpop.permute.xlu0 %469
        %vm471 = vcmp.eq.s32.totalorder %v470, 1
        %472 = vrot.lane.b32.xlu0 %v360, 96
        %v473 = vpop.permute.xlu0 %472
        %v475 = vsel %vm471, %v463, %v473
        %477 = vrot.lane.b32.xlu0 %v475, 32
        %v478 = vpop.permute.xlu0 %477
        %480 = vst.msk [vmem:[#allocation2] sm:$0xff] %vm362, %v478
        %v481 = vsel %vm471, %v457, %v445
        %483 = vrot.lane.b32.xlu0 %v481, 96
        %v484 = vpop.permute.xlu0 %483
        %486 = vst.msk [vmem:[#allocation3] sm:$0xff] %vm362, %v484
        %v487 = vsel %vm471, %v463, 0.0
        %489 = vrot.lane.b32.xlu0 %v487, 32
        %v490 = vpop.permute.xlu0 %489
        %492 = vst.msk [vmem:[%s335] sm:$0xff] %vm362, %v490
        %v493 = vld [vmem:[#allocation2] sm:$0xff]
        %v494 = vld [vmem:[#allocation3] sm:$0xff]
        %v496 = vsel %vm362, %v493, 0
        %498 = vmatprep.subr.mxu0 0.0
        %499 = vmatpush1.msra.mxu0 %v355
        %500 = vmatprep.subr.mxu0 0.0
        %501 = vmatpush1.msra.mxu0 %v356
        %502 = vmatprep.subr.mxu0 0.0
        %503 = vmatpush1.msra.mxu0 %v357
        %504 = vmatprep.subr.mxu0 0.0
        %505 = vmatpush1.msra.mxu0 %v358
        %506 = vmatprep.subr.mxu0 0.0
        %507 = vmatpush1.msra.mxu0 0.0
        %508 = vmatprep.subr.mxu0 0.0
        %509 = vmatpush1.msra.mxu0 0.0
        %510 = vmatprep.subr.mxu0 0.0
        %511 = vmatpush1.msra.mxu0 0.0
        %512 = vmatprep.subr.mxu0 0.0
        %513 = vmatpush1.msra.mxu0 0.0
        %514 = vmatprep.subr.mxu0 0.0
        %515 = vmatpush1.msra.mxu0 0.0
        %516 = vmatprep.subr.mxu0 0.0
        %517 = vmatpush1.msra.mxu0 0.0
        %518 = vmatprep.subr.mxu0 0.0
        %519 = vmatpush1.msra.mxu0 0.0
        %520 = vmatprep.subr.mxu0 0.0
        %521 = vmatpush1.msra.mxu0 0.0
        %522 = vmatprep.subr.mxu0 0.0
        %523 = vmatpush1.msra.mxu0 0.0
        %524 = vmatprep.subr.mxu0 0.0
        %525 = vmatpush1.msra.mxu0 0.0
        %526 = vmatprep.subr.mxu0 0.0
        %527 = vmatpush1.msra.mxu0 0.0
        %528 = vmatprep.subr.mxu0 0.0
        %529 = vmatpush1.msra.mxu0 0.0
        %530 = vmatprep.subr.mxu0 0.0
        %531 = vmatpush1.msra.mxu0 0.0
        %532 = vmatprep.subr.mxu0 0.0
        %533 = vmatpush1.msra.mxu0 0.0
        %534 = vmatprep.subr.mxu0 0.0
        %535 = vmatpush1.msra.mxu0 0.0
        %536 = vmatprep.subr.mxu0 0.0
        %537 = vmatpush1.msra.mxu0 0.0
        %538 = vmatprep.subr.mxu0 0.0
        %539 = vmatpush1.msra.mxu0 0.0
        %540 = vmatprep.subr.mxu0 0.0
        %541 = vmatpush1.msra.mxu0 0.0
        %542 = vmatprep.subr.mxu0 0.0
        %543 = vmatpush1.msra.mxu0 0.0
        %544 = vmatprep.subr.mxu0 0.0
        %545 = vmatpush1.msra.mxu0 0.0
        %546 = vmatprep.subr.mxu0 0.0
        %547 = vmatpush1.msra.mxu0 0.0
        %548 = vmatprep.subr.mxu0 0.0
        %549 = vmatpush1.msra.mxu0 0.0
        %550 = vmatprep.subr.mxu0 0.0
        %551 = vmatpush1.msra.mxu0 0.0
        %552 = vmatprep.subr.mxu0 0.0
        %553 = vmatpush1.msra.mxu0 0.0
        %554 = vmatprep.subr.mxu0 0.0
        %555 = vmatpush1.msra.mxu0 0.0
        %556 = vmatprep.subr.mxu0 0.0
        %557 = vmatpush1.msra.mxu0 0.0
        %558 = vmatprep.subr.mxu0 0.0
        %559 = vmatpush1.msra.mxu0 0.0
        %560 = vmatprep.subr.mxu0 0.0
        %561 = vmatpush1.msra.mxu0 0.0
        %562 = vmatprep.mubr.f32.mxu0 0.0
        %563 = vmatmul.mubr.f32.gmra.mrb[0].mxu0 %v496
        %v564 = vpop.f32.mrb[0].mxu0
        %v565 = vadd.f32 0.0, %v564
        %v566 = vpop.f32.mrb[0].mxu0
        %567 = vdwg.mxu0
        %s568 = scalar_lea.vmem %s296, 8 [#allocation9]
        %v569 = vld [vmem:[%s568] sm:$0xff]
        %v570 = vadd.f32 %v569, %v565
        %v571 = vmul.f32 %v570, 0.5
        %v572 = vtanh.pop %v571
        %v573 = vadd.f32 %v572, 1.0
        %v574 = vmul.f32 %v573, 0.5
        %v575 = vtanh.pop %v570
        %577 = vrot.lane.b32.xlu0 %v494, 32
        %v578 = vpop.permute.xlu0 %577
        %v580 = vmul.f32 %v574, %v578
        %582 = vrot.lane.b32.xlu0 %v575, 64
        %v583 = vpop.permute.xlu0 %582
        %v585 = vmul.f32 %v574, %v583
        %587 = vrot.lane.b32.xlu0 %v585, 32
        %v588 = vpop.permute.xlu0 %587
        %v590 = vadd.f32 %v580, %v588
        %v591 = vtanh.pop %v590
        %593 = vrot.lane.b32.xlu0 %v591, 64
        %v594 = vpop.permute.xlu0 %593
        %v596 = vmul.f32 %v574, %v594
        %s597 = sadd.s32 %s464, 1
        %v598 = vstv %s597
        %vm599 = vcmp.lt.s32.totalorder %v598, %v359
        %v600 = vsel %vm599, 1, 0
        %601 = vset.pattern.permute.xlu0 0
        %602 = vperm.xlu0 %601, %v600
        %v603 = vpop.permute.xlu0 %602
        %vm604 = vcmp.eq.s32.totalorder %v603, 1
        %605 = vrot.lane.b32.xlu0 %v493, 96
        %v606 = vpop.permute.xlu0 %605
        %v608 = vsel %vm604, %v596, %v606
        %610 = vrot.lane.b32.xlu0 %v608, 32
        %v611 = vpop.permute.xlu0 %610
        %613 = vst.msk [vmem:[#allocation2] sm:$0xff] %vm362, %v611
        %v614 = vsel %vm604, %v590, %v578
        %616 = vrot.lane.b32.xlu0 %v614, 96
        %v617 = vpop.permute.xlu0 %616
        %619 = vst.msk [vmem:[#allocation3] sm:$0xff] %vm362, %v617
        %v620 = vsel %vm604, %v596, 0.0
        %622 = vrot.lane.b32.xlu0 %v620, 32
        %v623 = vpop.permute.xlu0 %622
        %s625 = scalar_lea.vmem %s335, 8 [#allocation10]
        %626 = vst.msk [vmem:[%s625] sm:$0xff] %vm362, %v623
        %v627 = vld [vmem:[#allocation2] sm:$0xff]
        %v628 = vld [vmem:[#allocation3] sm:$0xff]
        %v630 = vsel %vm362, %v627, 0
        %632 = vmatprep.subr.mxu0 0.0
        %633 = vmatpush1.msra.mxu0 %v355
        %634 = vmatprep.subr.mxu0 0.0
        %635 = vmatpush1.msra.mxu0 %v356
        %636 = vmatprep.subr.mxu0 0.0
        %637 = vmatpush1.msra.mxu0 %v357
        %638 = vmatprep.subr.mxu0 0.0
        %639 = vmatpush1.msra.mxu0 %v358
        %640 = vmatprep.subr.mxu0 0.0
        %641 = vmatpush1.msra.mxu0 0.0
        %642 = vmatprep.subr.mxu0 0.0
        %643 = vmatpush1.msra.mxu0 0.0
        %644 = vmatprep.subr.mxu0 0.0
        %645 = vmatpush1.msra.mxu0 0.0
        %646 = vmatprep.subr.mxu0 0.0
        %647 = vmatpush1.msra.mxu0 0.0
        %648 = vmatprep.subr.mxu0 0.0
        %649 = vmatpush1.msra.mxu0 0.0
        %650 = vmatprep.subr.mxu0 0.0
        %651 = vmatpush1.msra.mxu0 0.0
        %652 = vmatprep.subr.mxu0 0.0
        %653 = vmatpush1.msra.mxu0 0.0
        %654 = vmatprep.subr.mxu0 0.0
        %655 = vmatpush1.msra.mxu0 0.0
        %656 = vmatprep.subr.mxu0 0.0
        %657 = vmatpush1.msra.mxu0 0.0
        %658 = vmatprep.subr.mxu0 0.0
        %659 = vmatpush1.msra.mxu0 0.0
        %660 = vmatprep.subr.mxu0 0.0
        %661 = vmatpush1.msra.mxu0 0.0
        %662 = vmatprep.subr.mxu0 0.0
        %663 = vmatpush1.msra.mxu0 0.0
        %664 = vmatprep.subr.mxu0 0.0
        %665 = vmatpush1.msra.mxu0 0.0
        %666 = vmatprep.subr.mxu0 0.0
        %667 = vmatpush1.msra.mxu0 0.0
        %668 = vmatprep.subr.mxu0 0.0
        %669 = vmatpush1.msra.mxu0 0.0
        %670 = vmatprep.subr.mxu0 0.0
        %671 = vmatpush1.msra.mxu0 0.0
        %672 = vmatprep.subr.mxu0 0.0
        %673 = vmatpush1.msra.mxu0 0.0
        %674 = vmatprep.subr.mxu0 0.0
        %675 = vmatpush1.msra.mxu0 0.0
        %676 = vmatprep.subr.mxu0 0.0
        %677 = vmatpush1.msra.mxu0 0.0
        %678 = vmatprep.subr.mxu0 0.0
        %679 = vmatpush1.msra.mxu0 0.0
        %680 = vmatprep.subr.mxu0 0.0
        %681 = vmatpush1.msra.mxu0 0.0
        %682 = vmatprep.subr.mxu0 0.0
        %683 = vmatpush1.msra.mxu0 0.0
        %684 = vmatprep.subr.mxu0 0.0
        %685 = vmatpush1.msra.mxu0 0.0
        %686 = vmatprep.subr.mxu0 0.0
        %687 = vmatpush1.msra.mxu0 0.0
        %688 = vmatprep.subr.mxu0 0.0
        %689 = vmatpush1.msra.mxu0 0.0
        %690 = vmatprep.subr.mxu0 0.0
        %691 = vmatpush1.msra.mxu0 0.0
        %692 = vmatprep.subr.mxu0 0.0
        %693 = vmatpush1.msra.mxu0 0.0
        %694 = vmatprep.subr.mxu0 0.0
        %695 = vmatpush1.msra.mxu0 0.0
        %696 = vmatprep.mubr.f32.mxu0 0.0
        %697 = vmatmul.mubr.f32.gmra.mrb[0].mxu0 %v630
        %v698 = vpop.f32.mrb[0].mxu0
        %v699 = vadd.f32 0.0, %v698
        %v700 = vpop.f32.mrb[0].mxu0
        %701 = vdwg.mxu0
        %s702 = scalar_lea.vmem %s296, 16 [#allocation9]
        %v703 = vld [vmem:[%s702] sm:$0xff]
        %v704 = vadd.f32 %v703, %v699
        %v705 = vmul.f32 %v704, 0.5
        %v706 = vtanh.pop %v705
        %v707 = vadd.f32 %v706, 1.0
        %v708 = vmul.f32 %v707, 0.5
        %v709 = vtanh.pop %v704
        %711 = vrot.lane.b32.xlu0 %v628, 32
        %v712 = vpop.permute.xlu0 %711
        %v714 = vmul.f32 %v708, %v712
        %716 = vrot.lane.b32.xlu0 %v709, 64
        %v717 = vpop.permute.xlu0 %716
        %v719 = vmul.f32 %v708, %v717
        %721 = vrot.lane.b32.xlu0 %v719, 32
        %v722 = vpop.permute.xlu0 %721
        %v724 = vadd.f32 %v714, %v722
        %v725 = vtanh.pop %v724
        %727 = vrot.lane.b32.xlu0 %v725, 64
        %v728 = vpop.permute.xlu0 %727
        %v730 = vmul.f32 %v708, %v728
        %s731 = sadd.s32 %s464, 2
        %v732 = vstv %s731
        %vm733 = vcmp.lt.s32.totalorder %v732, %v359
        %v734 = vsel %vm733, 1, 0
        %735 = vset.pattern.permute.xlu0 0
        %736 = vperm.xlu0 %735, %v734
        %v737 = vpop.permute.xlu0 %736
        %vm738 = vcmp.eq.s32.totalorder %v737, 1
        %739 = vrot.lane.b32.xlu0 %v627, 96
        %v740 = vpop.permute.xlu0 %739
        %v742 = vsel %vm738, %v730, %v740
        %744 = vrot.lane.b32.xlu0 %v742, 32
        %v745 = vpop.permute.xlu0 %744
        %747 = vst.msk [vmem:[#allocation2] sm:$0xff] %vm362, %v745
        %v748 = vsel %vm738, %v724, %v712
        %750 = vrot.lane.b32.xlu0 %v748, 96
        %v751 = vpop.permute.xlu0 %750
        %753 = vst.msk [vmem:[#allocation3] sm:$0xff] %vm362, %v751
        %v754 = vsel %vm738, %v730, 0.0
        %756 = vrot.lane.b32.xlu0 %v754, 32
        %v757 = vpop.permute.xlu0 %756
        %s759 = scalar_lea.vmem %s335, 16 [#allocation10]
        %760 = vst.msk [vmem:[%s759] sm:$0xff] %vm362, %v757
        %v761 = vld [vmem:[#allocation2] sm:$0xff]
        %v762 = vld [vmem:[#allocation3] sm:$0xff]
        %v764 = vsel %vm362, %v761, 0
        %766 = vmatprep.subr.mxu0 0.0
        %767 = vmatpush1.msra.mxu0 %v355
        %768 = vmatprep.subr.mxu0 0.0
        %769 = vmatpush1.msra.mxu0 %v356
        %770 = vmatprep.subr.mxu0 0.0
        %771 = vmatpush1.msra.mxu0 %v357
        %772 = vmatprep.subr.mxu0 0.0
        %773 = vmatpush1.msra.mxu0 %v358
        %774 = vmatprep.subr.mxu0 0.0
        %775 = vmatpush1.msra.mxu0 0.0
        %776 = vmatprep.subr.mxu0 0.0
        %777 = vmatpush1.msra.mxu0 0.0
        %778 = vmatprep.subr.mxu0 0.0
        %779 = vmatpush1.msra.mxu0 0.0
        %780 = vmatprep.subr.mxu0 0.0
        %781 = vmatpush1.msra.mxu0 0.0
        %782 = vmatprep.subr.mxu0 0.0
        %783 = vmatpush1.msra.mxu0 0.0
        %784 = vmatprep.subr.mxu0 0.0
        %785 = vmatpush1.msra.mxu0 0.0
        %786 = vmatprep.subr.mxu0 0.0
        %787 = vmatpush1.msra.mxu0 0.0
        %788 = vmatprep.subr.mxu0 0.0
        %789 = vmatpush1.msra.mxu0 0.0
        %790 = vmatprep.subr.mxu0 0.0
        %791 = vmatpush1.msra.mxu0 0.0
        %792 = vmatprep.subr.mxu0 0.0
        %793 = vmatpush1.msra.mxu0 0.0
        %794 = vmatprep.subr.mxu0 0.0
        %795 = vmatpush1.msra.mxu0 0.0
        %796 = vmatprep.subr.mxu0 0.0
        %797 = vmatpush1.msra.mxu0 0.0
        %798 = vmatprep.subr.mxu0 0.0
        %799 = vmatpush1.msra.mxu0 0.0
        %800 = vmatprep.subr.mxu0 0.0
        %801 = vmatpush1.msra.mxu0 0.0
        %802 = vmatprep.subr.mxu0 0.0
        %803 = vmatpush1.msra.mxu0 0.0
        %804 = vmatprep.subr.mxu0 0.0
        %805 = vmatpush1.msra.mxu0 0.0
        %806 = vmatprep.subr.mxu0 0.0
        %807 = vmatpush1.msra.mxu0 0.0
        %808 = vmatprep.subr.mxu0 0.0
        %809 = vmatpush1.msra.mxu0 0.0
        %810 = vmatprep.subr.mxu0 0.0
        %811 = vmatpush1.msra.mxu0 0.0
        %812 = vmatprep.subr.mxu0 0.0
        %813 = vmatpush1.msra.mxu0 0.0
        %814 = vmatprep.subr.mxu0 0.0
        %815 = vmatpush1.msra.mxu0 0.0
        %816 = vmatprep.subr.mxu0 0.0
        %817 = vmatpush1.msra.mxu0 0.0
        %818 = vmatprep.subr.mxu0 0.0
        %819 = vmatpush1.msra.mxu0 0.0
        %820 = vmatprep.subr.mxu0 0.0
        %821 = vmatpush1.msra.mxu0 0.0
        %822 = vmatprep.subr.mxu0 0.0
        %823 = vmatpush1.msra.mxu0 0.0
        %824 = vmatprep.subr.mxu0 0.0
        %825 = vmatpush1.msra.mxu0 0.0
        %826 = vmatprep.subr.mxu0 0.0
        %827 = vmatpush1.msra.mxu0 0.0
        %828 = vmatprep.subr.mxu0 0.0
        %829 = vmatpush1.msra.mxu0 0.0
        %830 = vmatprep.mubr.f32.mxu0 0.0
        %831 = vmatmul.mubr.f32.gmra.mrb[0].mxu0 %v764
        %v832 = vpop.f32.mrb[0].mxu0
        %v833 = vadd.f32 0.0, %v832
        %v834 = vpop.f32.mrb[0].mxu0
        %835 = vdwg.mxu0
        %s836 = scalar_lea.vmem %s296, 24 [#allocation9]
        %v837 = vld [vmem:[%s836] sm:$0xff]
        %v838 = vadd.f32 %v837, %v833
        %v839 = vmul.f32 %v838, 0.5
        %v840 = vtanh.pop %v839
        %v841 = vadd.f32 %v840, 1.0
        %v842 = vmul.f32 %v841, 0.5
        %v843 = vtanh.pop %v838
        %845 = vrot.lane.b32.xlu0 %v762, 32
        %v846 = vpop.permute.xlu0 %845
        %v848 = vmul.f32 %v842, %v846
        %850 = vrot.lane.b32.xlu0 %v843, 64
        %v851 = vpop.permute.xlu0 %850
        %v853 = vmul.f32 %v842, %v851
        %855 = vrot.lane.b32.xlu0 %v853, 32
        %v856 = vpop.permute.xlu0 %855
        %v858 = vadd.f32 %v848, %v856
        %v859 = vtanh.pop %v858
        %861 = vrot.lane.b32.xlu0 %v859, 64
        %v862 = vpop.permute.xlu0 %861
        %v864 = vmul.f32 %v842, %v862
        %s865 = sadd.s32 %s464, 3
        %v866 = vstv %s865
        %vm867 = vcmp.lt.s32.totalorder %v866, %v359
        %v868 = vsel %vm867, 1, 0
        %869 = vset.pattern.permute.xlu0 0
        %870 = vperm.xlu0 %869, %v868
        %v871 = vpop.permute.xlu0 %870
        %vm872 = vcmp.eq.s32.totalorder %v871, 1
        %873 = vrot.lane.b32.xlu0 %v761, 96
        %v874 = vpop.permute.xlu0 %873
        %v876 = vsel %vm872, %v864, %v874
        %878 = vrot.lane.b32.xlu0 %v876, 32
        %v879 = vpop.permute.xlu0 %878
        %881 = vst.msk [vmem:[#allocation2] sm:$0xff] %vm362, %v879
        %v882 = vsel %vm872, %v858, %v846
        %884 = vrot.lane.b32.xlu0 %v882, 96
        %v885 = vpop.permute.xlu0 %884
        %887 = vst.msk [vmem:[#allocation3] sm:$0xff] %vm362, %v885
        %v888 = vsel %vm872, %v864, 0.0
        %890 = vrot.lane.b32.xlu0 %v888, 32
        %v891 = vpop.permute.xlu0 %890
        %s893 = scalar_lea.vmem %s335, 24 [#allocation10]
        %894 = vst.msk [vmem:[%s893] sm:$0xff] %vm362, %v891
        %s895 = sand.u32 %s172, 1
        %s896 = scalar_lea.sflag [#allocation6], %s895
        %s897 = sand.u32 %s172, 1
        %s898 = smul.addr %s897, 32
        %s899 = scalar_lea.vmem [#allocation10], %s898
        // Predicated region
        $region57: #{tpu_custom_call.1} parent=39 // pred_check
          %p900 = pneg %p182
        $region58: #{tpu_custom_call.1} parent=39 // pred_check_branch
          %902 = sbr.rel (%p900) target = $region60
        $region59: #{tpu_custom_call.1} parent=39 // pred_region
          %s903 = smul.u32 4, %s28
          %s905 = ssub.s32 512, 512
          %906 = vsyncadd %s896, %s905
          %s907 = smul.addr %s903, 2
          %s908 = sadd.s32 %s27, %s907
          %s909 = smul.addr %s908, 128
          %s910 = scalar_lea.hbm %s5, %s909
          %s911 = sshll.u32 %s899, 4
          %s912 = int_to_ptr.vmem [resolvable:$true] %s911
          %917 = dma.vmem_to_hbm [thread:$0]  %s912, 512, %s910, %s896, 128, 256, 8
        $region60: #{tpu_custom_call.1} parent=39 // pred_fallthru
          _
      $region40: #{tpu_custom_call.1} parent=5 // pred_fallthru
        _
      %p918 = scmp.le.s32.totalorder 2, %s18
      // Predicated region
      $region61: #{tpu_custom_call.1} parent=5 // pred_check
        %p919 = pneg %p918
      $region62: #{tpu_custom_call.1} parent=5 // pred_check_branch
        %921 = sbr.rel (%p919) target = $region64
      $region63: #{tpu_custom_call.1} parent=5 // pred_region
        %s922 = ssub.s32 %s18, 2
        // Predicated region
        $region65: #{tpu_custom_call.1} parent=63 // pred_check
          %p923 = pneg %p188
        $region66: #{tpu_custom_call.1} parent=63 // pred_check_branch
          %925 = sbr.rel (%p923) target = $region68
        $region67: #{tpu_custom_call.1} parent=63 // pred_region
          %s926 = sand.u32 %s173, 1
          %s927 = scalar_lea.sflag [#allocation6], %s926
          %s928 = sand.u32 %s173, 1
          %s929 = smul.addr %s928, 32
          %s930 = scalar_lea.vmem [#allocation10], %s929
          %931 = dma.done %s927, 512
        $region68: #{tpu_custom_call.1} parent=63 // pred_fallthru
          _
      $region64: #{tpu_custom_call.1} parent=5 // pred_fallthru
        _
    $region6: #{tpu_custom_call.1} parent=1 // loop_footer
      %s22 = sadd.s32 1, %s18
    $region7: #{tpu_custom_call.1} parent=1 // loop_footer_branch
      %17 = sbr.rel target = $region3
    $region8: #{tpu_custom_call.1} parent=1 // loop_exit
      _
    %932 = vsyncpa [#allocation5], 1
    %s933 = scalar_lea.sflag [#allocation5], 1
    %934 = vsyncpa %s933, 1
    %935 = vsyncpa [#allocation8], 1
    %936 = vsyncpa [#allocation6], 1
    %s937 = scalar_lea.sflag [#allocation6], 1
    %938 = vsyncpa %s937, 1

</llo_original>
